<compile_context>
chip_gen: v5e
topology: v5e:2x2
jax: 0.10.0
libtpu: 0.0.40
codegen_flags: <defaults>
</compile_context>

<pallas_src>
import functools

import jax
import jax.numpy as jnp
from jax.experimental import pallas as pl
from jax.experimental.pallas import tpu as pltpu

EPS = 1e-5


def _round_up(x, m):
    return ((x + m - 1) // m) * m


# ------------------------------ Pallas kernel ------------------------------- #

def _make_block_kernel(*, taps1, taps2, sc_tap, has_proj, LLp, MARGIN, M,
                       CIN_P, CP, cdt):
    """Fused conv1+bn1+relu -> conv2+bn2 -> (+shortcut) -> relu kernel.

    taps1 : list of (source_copy_index, flat_lane_offset) for conv1's 9 taps.
    taps2 : list of flat_lane_offset for conv2's 9 taps (reads the out1 scratch).
    sc_tap: (source_copy_index, flat_lane_offset) for the projection-shortcut input.
    """
    inv_m = 1.0 / float(M)

    def kernel(*refs):
        if has_proj:
            (src_ref, mrow_ref, mcol_ref, w1_ref, g1_ref, b1_ref,
             w2_ref, g2_ref, b2_ref, ws_ref, gs_ref, bs_ref,
             o_ref, im1_ref, o1p_ref, im2_ref) = refs
        else:
            (src_ref, mrow_ref, mcol_ref, w1_ref, g1_ref, b1_ref,
             w2_ref, g2_ref, b2_ref, sc_ref,
             o_ref, im1_ref, o1p_ref, im2_ref) = refs

        mask_row = mrow_ref[...]            # (1, LLp)  1.0 on valid output pixels
        mask_col = mcol_ref[...]            # (LLp, 1)  same mask, as an MXU reduction RHS

        def batchnorm(acc, g_ref, b_ref):
            # masked one-pass batch statistics; lane reductions run on the MXU
            s = jnp.dot(acc, mask_col, preferred_element_type=jnp.float32)        # (P,1)
            ss = jnp.dot(acc * acc, mask_col, preferred_element_type=jnp.float32)  # (P,1)
            mean = s * inv_m
            var = ss * inv_m - mean * mean
            # TODO(synk): one-pass var = E[x^2]-mean^2 can cancel when |mean| >> std;
            # switch to a two-pass/Welford form if BN stats must be robust.
            return (acc - mean) * jax.lax.rsqrt(var + EPS) * g_ref[...] + b_ref[...]

        # ---- conv1: stage 9 shifted taps into a VMEM im2col slab, one deep-K matmul ----
        for t, (s_idx, d) in enumerate(taps1):
            im1_ref[t * CIN_P:(t + 1) * CIN_P, :] = \
                src_ref[s_idx, :, MARGIN + d:MARGIN + d + LLp]
        acc1 = jnp.dot(w1_ref[...], im1_ref[...], preferred_element_type=jnp.float32)

        # BN1 + ReLU; the mask also zeroes the padding ring / tail that conv2 will read.
        out1 = jnp.maximum(batchnorm(acc1, g1_ref, b1_ref), 0.0) * mask_row

        # Stage out1 into the margin-padded scratch.  Only the margin strips need zeroing
        # (lane-aligned 128-wide stores); the interior is fully overwritten.
        o1p_ref[:, 0:MARGIN] = jnp.zeros((CP, MARGIN), cdt)
        o1p_ref[:, MARGIN + LLp:MARGIN + LLp + MARGIN] = jnp.zeros((CP, MARGIN), cdt)
        o1p_ref[:, MARGIN:MARGIN + LLp] = out1.astype(cdt)

        # ---- conv2 (stride 1, padding 1): same stacked-K scheme -------------------------
        for t, d in enumerate(taps2):
            im2_ref[t * CP:(t + 1) * CP, :] = o1p_ref[:, MARGIN + d:MARGIN + d + LLp]
        acc2 = jnp.dot(w2_ref[...], im2_ref[...], preferred_element_type=jnp.float32)
        y = batchnorm(acc2, g2_ref, b2_ref)

        # ---- shortcut --------------------------------------------------------------------
        if has_proj:
            s_idx, d = sc_tap
            win = src_ref[s_idx, :, MARGIN + d:MARGIN + d + LLp]
            acc_s = jnp.dot(ws_ref[...], win, preferred_element_type=jnp.float32)
            sc = batchnorm(acc_s, gs_ref, bs_ref)
        else:
            sc = sc_ref[...]                # identity shortcut kept in exact f32

        o_ref[...] = jnp.maximum(y + sc, 0.0)

    return kernel


def _full_spec(shape):
    nd = len(shape)
    return pl.BlockSpec(shape, lambda i: (0,) * nd)


# ------------------------------- parameters --------------------------------- #

def init_basic_block_params(key, in_planes, planes, stride):
    ks = jax.random.split(key, 8)
    p = {
        "conv1": 0.1 * jax.random.normal(ks[0], (planes, in_planes, 3, 3), jnp.float32),
        "g1": 1.0 + 0.1 * jax.random.normal(ks[1], (planes,), jnp.float32),
        "b1": 0.1 * jax.random.normal(ks[2], (planes,), jnp.float32),
        "conv2": 0.1 * jax.random.normal(ks[3], (planes, planes, 3, 3), jnp.float32),
        "g2": 1.0 + 0.1 * jax.random.normal(ks[4], (planes,), jnp.float32),
        "b2": 0.1 * jax.random.normal(ks[5], (planes,), jnp.float32),
    }
    if stride != 1 or in_planes != planes:   # option 'B' projection shortcut
        p["conv_s"] = 0.1 * jax.random.normal(ks[6], (planes, in_planes, 1, 1), jnp.float32)
        p["gs"] = 1.0 + 0.05 * jax.random.normal(ks[7], (planes,), jnp.float32)
        p["bs"] = 0.05 * jax.random.normal(ks[7], (planes,), jnp.float32)
    return p


# ------------------------------ public wrapper ------------------------------ #

@functools.partial(jax.jit, static_argnames=("stride", "compute_dtype"))
def basic_block_forward(x_nchw, params, stride, compute_dtype=jnp.bfloat16):
    x = x_nchw.astype(jnp.float32)
    N, cin, H, W = x.shape
    planes = params["conv1"].shape[0]
    has_proj = (stride != 1) or (cin != planes)
    assert stride in (1, 2)

    cdt = jnp.dtype(compute_dtype)
    SUB = 8 if cdt.itemsize >= 4 else 16          # sublane multiple for this dtype
    CIN_P = _round_up(cin, SUB)
    CP = _round_up(planes, SUB)

    # ---- flat, margin-padded source copies (compute-dtype, no HBM im2col) ------
    xp = jnp.pad(x, ((0, 0), (0, 0), (1, 1), (1, 1)))          # (N, Cin, H+2, W+2)
    if stride == 1:
        Ho, Wo = H, W
        copies = [xp]
    else:
        assert H % 2 == 0 and W % 2 == 0
        Ho, Wo = H // 2, W // 2
        copies = []
        for a in (0, 1):                                       # phase split (space-to-depth)
            for b in (0, 1):
                ph = xp[:, :, a::2, b::2]                      # (N, Cin, Ho+1, Wo+1)
                copies.append(jnp.pad(ph, ((0, 0), (0, 0), (0, 1), (0, 1))))
    Hp, Wp = Ho + 2, Wo + 2
    LL0 = N * Hp * Wp                                          # real flat (lane) extent
    LLp = _round_up(LL0, 128)                                  # lane-aligned extent
    MARGIN = _round_up(Wp + 1, 128)                            # lane-aligned tap margin
    M = N * Ho * Wo                                            # valid pixels (BN population)

    flat = []
    for c in copies:
        f = jnp.transpose(c, (1, 0, 2, 3)).reshape(cin, LL0)
        f = jnp.pad(f, ((0, CIN_P - cin), (MARGIN, MARGIN + LLp - LL0)))
        flat.append(f)
    src = jnp.stack(flat, axis=0).astype(cdt)                  # (S, CIN_P, LLp + 2*MARGIN)

    # valid-pixel mask: row form (epilogue masking) and column form (MXU BN reduction RHS)
    rok = (jnp.arange(Hp) >= 1) & (jnp.arange(Hp) <= Ho)
    cok = (jnp.arange(Wp) >= 1) & (jnp.arange(Wp) <= Wo)
    mask0 = jnp.tile((rok[:, None] & cok[None, :]).reshape(-1), N).astype(jnp.float32)
    mask = jnp.zeros((LLp,), jnp.float32).at[:LL0].set(mask0)
    mask_row = mask.reshape(1, LLp)
    mask_col = mask.reshape(LLp, 1)

    # stacked-K weights (tap-major along the contraction axis), padded to sublane multiples
    def stack_taps(w, cout, cin_, coutp, cinp):
        wt = jnp.transpose(w, (0, 2, 3, 1)).reshape(cout, 9, cin_)     # [p, (ki,kj), c]
        full = jnp.zeros((coutp, 9, cinp), jnp.float32).at[:cout, :, :cin_].set(wt)
        return full.reshape(coutp, 9 * cinp).astype(cdt)

    def pad_vec(v, fill):
        return jnp.full((CP,), fill, jnp.float32).at[:planes].set(
            v.astype(jnp.float32)).reshape(CP, 1)

    w1 = stack_taps(params["conv1"], planes, cin, CP, CIN_P)
    w2 = stack_taps(params["conv2"], planes, planes, CP, CP)
    g1, b1 = pad_vec(params["g1"], 1.0), pad_vec(params["b1"], 0.0)
    g2, b2 = pad_vec(params["g2"], 1.0), pad_vec(params["b2"], 0.0)

    # static tap metadata: (source copy, flat lane offset); tap order = (ki, kj)
    if stride == 1:
        taps1 = [(0, (ki - 1) * Wp + (kj - 1)) for ki in range(3) for kj in range(3)]
        sc_tap = (0, 0)
    else:
        taps1 = [(2 * (ki % 2) + (kj % 2), (ki // 2 - 1) * Wp + (kj // 2 - 1))
                 for ki in range(3) for kj in range(3)]
        sc_tap = (3, -(Wp + 1))                                # phase (1,1), offset (-1,-1)
    taps2 = [(ki - 1) * Wp + (kj - 1) for ki in range(3) for kj in range(3)]

    inputs = [src, mask_row, mask_col, w1, g1, b1, w2, g2, b2]
    if has_proj:
        ws = jnp.zeros((CP, CIN_P), jnp.float32).at[:planes, :cin].set(
            params["conv_s"].reshape(planes, cin)).astype(cdt)
        inputs += [ws, pad_vec(params["gs"], 1.0), pad_vec(params["bs"], 0.0)]
    else:
        # exact-f32 identity shortcut aligned to the flat output grid
        sc = jnp.zeros((CP, N, Hp, Wp), jnp.float32).at[:cin, :, 1:Ho + 1, 1:Wo + 1].set(
            jnp.transpose(x, (1, 0, 2, 3)))
        sc = jnp.pad(sc.reshape(CP, LL0), ((0, 0), (0, LLp - LL0)))
        inputs += [sc]

    kernel = _make_block_kernel(taps1=taps1, taps2=taps2, sc_tap=sc_tap,
                                has_proj=has_proj, LLp=LLp, MARGIN=MARGIN, M=M,
                                CIN_P=CIN_P, CP=CP, cdt=cdt)

    scratch_shapes = [pltpu.VMEM((9 * CIN_P, LLp), cdt),                 # conv1 im2col
                      pltpu.VMEM((CP, LLp + 2 * MARGIN), cdt),           # staged out1
                      pltpu.VMEM((9 * CP, LLp), cdt)]                    # conv2 im2col

    # VMEM budget from the actual buffers (x2 for pipelining buffers) capped for v7x (64 MiB)
    in_bytes = sum(int(a.size) * a.dtype.itemsize for a in inputs)
    out_bytes = CP * LLp * 4
    scratch_bytes = ((9 * CIN_P + 9 * CP) * LLp + CP * (LLp + 2 * MARGIN)) * cdt.itemsize
    vmem_limit = int(min(56 << 20,
                         max(2 * (in_bytes + out_bytes) + scratch_bytes + (2 << 20),
                             16 << 20)))

    flops = 2 * M * (9 * cin * planes + 9 * planes * planes
                     + (cin * planes if has_proj else 0))
    transcendentals = (3 if has_proj else 2) * planes          # one rsqrt per channel per BN

    out_flat = pl.pallas_call(
        kernel,
        out_shape=jax.ShapeDtypeStruct((CP, LLp), jnp.float32),
        grid=(1,),
        in_specs=[_full_spec(a.shape) for a in inputs],
        out_specs=_full_spec((CP, LLp)),
        scratch_shapes=scratch_shapes,
        compiler_params=pltpu.CompilerParams(
            dimension_semantics=("arbitrary",),
            vmem_limit_bytes=vmem_limit),
        cost_estimate=pl.CostEstimate(flops=flops,
                                      transcendentals=transcendentals,
                                      bytes_accessed=in_bytes + out_bytes),
    )(*inputs)

    # crop channel / lane padding and the spatial padding ring; return NCHW
    out = out_flat[:planes, :LL0].reshape(planes, N, Hp, Wp)[:, :, 1:Ho + 1, 1:Wo + 1]
    return jnp.transpose(out, (1, 0, 2, 3))


# ---------------------------- pure-JAX reference ----------------------------- #

def _ref_bn(x, g, b):
    mean = jnp.mean(x, axis=(0, 2, 3), keepdims=True)
    var = jnp.mean((x - mean) ** 2, axis=(0, 2, 3), keepdims=True)
    return (x - mean) * jax.lax.rsqrt(var + EPS) * g.reshape(1, -1, 1, 1) + b.reshape(1, -1, 1, 1)


def _ref_conv(x, w, stride, pad):
    return jax.lax.conv_general_dilated(
        x, w, (stride, stride), [(pad, pad), (pad, pad)],
        dimension_numbers=("NCHW", "OIHW", "NCHW"))


def basic_block_ref(x, params, stride):
    out = jax.nn.relu(_ref_bn(_ref_conv(x, params["conv1"], stride, 1), params["g1"], params["b1"]))
    out = _ref_bn(_ref_conv(out, params["conv2"], 1, 1), params["g2"], params["b2"])
    if stride != 1 or x.shape[1] != params["conv1"].shape[0]:
        sc = _ref_bn(_ref_conv(x, params["conv_s"], stride, 0), params["gs"], params["bs"])
    else:
        sc = x
    return jax.nn.relu(out + sc)


# ----------------------------------- main ------------------------------------ #

if __name__ == "__main__":
    key = jax.random.PRNGKey(0)
    kx, kp1, kp2 = jax.random.split(key, 3)

    # Case 1: option 'B' projection shortcut (stride=2, in_planes != planes)
    x1 = jax.random.normal(kx, (2, 4, 16, 16), jnp.float32)      # NCHW
    params1 = init_basic_block_params(kp1, in_planes=4, planes=8, stride=2)
    r1 = basic_block_ref(x1, params1, stride=2)

    y1 = jax.block_until_ready(
        basic_block_forward(x1, params1, stride=2, compute_dtype=jnp.float32))
    assert y1.shape == (2, 8, 8, 8)
    assert jnp.allclose(y1, r1, rtol=1e-3, atol=1e-3), float(jnp.max(jnp.abs(y1 - r1)))

    # bf16 MXU fast path (default): loose tolerance, bf16 mantissa ~= 8 bits.
    y1_fast = jax.block_until_ready(basic_block_forward(x1, params1, stride=2))
    assert jnp.allclose(y1_fast, r1, rtol=1e-1, atol=1e-1), float(jnp.max(jnp.abs(y1_fast - r1)))

    # Case 2: identity shortcut (stride=1, in_planes == planes)
    x2 = jax.random.normal(kx, (2, 8, 16, 16), jnp.float32)
    params2 = init_basic_block_params(kp2, in_planes=8, planes=8, stride=1)
    r2 = basic_block_ref(x2, params2, stride=1)

    y2 = jax.block_until_ready(
        basic_block_forward(x2, params2, stride=1, compute_dtype=jnp.float32))
    assert y2.shape == (2, 8, 16, 16)
    assert jnp.allclose(y2, r2, rtol=1e-3, atol=1e-3), float(jnp.max(jnp.abs(y2 - r2)))

    y2_fast = jax.block_until_ready(basic_block_forward(x2, params2, stride=1))
    assert jnp.allclose(y2_fast, r2, rtol=1e-1, atol=1e-1), float(jnp.max(jnp.abs(y2_fast - r2)))

    print("KERNEL_OK")
</pallas_src>

<mosaic_0001>
module attributes {stable_mosaic.version = 11 : i64} {
  func.func @kernel(%arg0: i32, %arg1: memref<4x8x512xf32, #tpu.memory_space<vmem>>, %arg2: memref<1x256xf32, #tpu.memory_space<vmem>>, %arg3: memref<256x1xf32, #tpu.memory_space<vmem>>, %arg4: memref<8x72xf32, #tpu.memory_space<vmem>>, %arg5: memref<8x1xf32, #tpu.memory_space<vmem>>, %arg6: memref<8x1xf32, #tpu.memory_space<vmem>>, %arg7: memref<8x72xf32, #tpu.memory_space<vmem>>, %arg8: memref<8x1xf32, #tpu.memory_space<vmem>>, %arg9: memref<8x1xf32, #tpu.memory_space<vmem>>, %arg10: memref<8x8xf32, #tpu.memory_space<vmem>>, %arg11: memref<8x1xf32, #tpu.memory_space<vmem>>, %arg12: memref<8x1xf32, #tpu.memory_space<vmem>>, %arg13: memref<8x256xf32, #tpu.memory_space<vmem>>, %arg14: memref<72x256xf32, #tpu.memory_space<vmem>>, %arg15: memref<8x512xf32, #tpu.memory_space<vmem>>, %arg16: memref<72x256xf32, #tpu.memory_space<vmem>>) attributes {dimension_semantics = [#tpu.dimension_semantics<arbitrary>], iteration_bounds = array<i64: 1>, scalar_prefetch = 0 : i64, scratch_operands = 3 : i64, tpu.core_type = #tpu.core_type<tc>, window_params = [{pipeline_mode = #tpu.pipeline_mode<synchronous>, transform_indices = @transform_0, window_bounds = array<i64: 4, 8, 512>}, {pipeline_mode = #tpu.pipeline_mode<synchronous>, transform_indices = @transform_1, window_bounds = array<i64: 1, 256>}, {pipeline_mode = #tpu.pipeline_mode<synchronous>, transform_indices = @transform_2, window_bounds = array<i64: 256, 1>}, {pipeline_mode = #tpu.pipeline_mode<synchronous>, transform_indices = @transform_3, window_bounds = array<i64: 8, 72>}, {pipeline_mode = #tpu.pipeline_mode<synchronous>, transform_indices = @transform_4, window_bounds = array<i64: 8, 1>}, {pipeline_mode = #tpu.pipeline_mode<synchronous>, transform_indices = @transform_5, window_bounds = array<i64: 8, 1>}, {pipeline_mode = #tpu.pipeline_mode<synchronous>, transform_indices = @transform_6, window_bounds = array<i64: 8, 72>}, {pipeline_mode = #tpu.pipeline_mode<synchronous>, transform_indices = @transform_7, window_bounds = array<i64: 8, 1>}, {pipeline_mode = #tpu.pipeline_mode<synchronous>, transform_indices = @transform_8, window_bounds = array<i64: 8, 1>}, {pipeline_mode = #tpu.pipeline_mode<synchronous>, transform_indices = @transform_9, window_bounds = array<i64: 8, 8>}, {pipeline_mode = #tpu.pipeline_mode<synchronous>, transform_indices = @transform_10, window_bounds = array<i64: 8, 1>}, {pipeline_mode = #tpu.pipeline_mode<synchronous>, transform_indices = @transform_11, window_bounds = array<i64: 8, 1>}, {pipeline_mode = #tpu.pipeline_mode<synchronous>, transform_indices = @transform_12, window_bounds = array<i64: 8, 256>}]} {
    %c0 = arith.constant 0 : index
    %c0_0 = arith.constant 0 : index
    %0 = vector.load %arg2[%c0, %c0_0] : memref<1x256xf32, #tpu.memory_space<vmem>>, vector<1x256xf32>
    %c0_1 = arith.constant 0 : index
    %c0_2 = arith.constant 0 : index
    %1 = vector.load %arg3[%c0_1, %c0_2] : memref<256x1xf32, #tpu.memory_space<vmem>>, vector<256x1xf32>
    %c0_3 = arith.constant 0 : index
    %c0_4 = arith.constant 0 : index
    %c117 = arith.constant 117 : index
    %2 = vector.load %arg1[%c0_3, %c0_4, %c117] : memref<4x8x512xf32, #tpu.memory_space<vmem>>, vector<1x8x256xf32>
    %3 = vector.shape_cast %2 : vector<1x8x256xf32> to vector<8x256xf32>
    %c0_5 = arith.constant 0 : index
    %c0_6 = arith.constant 0 : index
    %4 = vector.load %arg14[%c0_5, %c0_6] : memref<72x256xf32, #tpu.memory_space<vmem>>, vector<8x256xf32>
    tpu.vector_store %arg14[%c0_5, %c0_6], %3 {strides = array<i32>} : memref<72x256xf32, #tpu.memory_space<vmem>>, vector<8x256xf32>,
    %c1 = arith.constant 1 : index
    %c0_7 = arith.constant 0 : index
    %c117_8 = arith.constant 117 : index
    %5 = vector.load %arg1[%c1, %c0_7, %c117_8] : memref<4x8x512xf32, #tpu.memory_space<vmem>>, vector<1x8x256xf32>
    %6 = vector.shape_cast %5 : vector<1x8x256xf32> to vector<8x256xf32>
    %c8 = arith.constant 8 : index
    %c0_9 = arith.constant 0 : index
    %7 = vector.load %arg14[%c8, %c0_9] : memref<72x256xf32, #tpu.memory_space<vmem>>, vector<8x256xf32>
    tpu.vector_store %arg14[%c8, %c0_9], %6 {strides = array<i32>} : memref<72x256xf32, #tpu.memory_space<vmem>>, vector<8x256xf32>,
    %c0_10 = arith.constant 0 : index
    %c0_11 = arith.constant 0 : index
    %c118 = arith.constant 118 : index
    %8 = vector.load %arg1[%c0_10, %c0_11, %c118] : memref<4x8x512xf32, #tpu.memory_space<vmem>>, vector<1x8x256xf32>
    %9 = vector.shape_cast %8 : vector<1x8x256xf32> to vector<8x256xf32>
    %c16 = arith.constant 16 : index
    %c0_12 = arith.constant 0 : index
    %10 = vector.load %arg14[%c16, %c0_12] : memref<72x256xf32, #tpu.memory_space<vmem>>, vector<8x256xf32>
    tpu.vector_store %arg14[%c16, %c0_12], %9 {strides = array<i32>} : memref<72x256xf32, #tpu.memory_space<vmem>>, vector<8x256xf32>,
    %c2 = arith.constant 2 : index
    %c0_13 = arith.constant 0 : index
    %c117_14 = arith.constant 117 : index
    %11 = vector.load %arg1[%c2, %c0_13, %c117_14] : memref<4x8x512xf32, #tpu.memory_space<vmem>>, vector<1x8x256xf32>
    %12 = vector.shape_cast %11 : vector<1x8x256xf32> to vector<8x256xf32>
    %c24 = arith.constant 24 : index
    %c0_15 = arith.constant 0 : index
    %13 = vector.load %arg14[%c24, %c0_15] : memref<72x256xf32, #tpu.memory_space<vmem>>, vector<8x256xf32>
    tpu.vector_store %arg14[%c24, %c0_15], %12 {strides = array<i32>} : memref<72x256xf32, #tpu.memory_space<vmem>>, vector<8x256xf32>,
    %c3 = arith.constant 3 : index
    %c0_16 = arith.constant 0 : index
    %c117_17 = arith.constant 117 : index
    %14 = vector.load %arg1[%c3, %c0_16, %c117_17] : memref<4x8x512xf32, #tpu.memory_space<vmem>>, vector<1x8x256xf32>
    %15 = vector.shape_cast %14 : vector<1x8x256xf32> to vector<8x256xf32>
    %c32 = arith.constant 32 : index
    %c0_18 = arith.constant 0 : index
    %16 = vector.load %arg14[%c32, %c0_18] : memref<72x256xf32, #tpu.memory_space<vmem>>, vector<8x256xf32>
    tpu.vector_store %arg14[%c32, %c0_18], %15 {strides = array<i32>} : memref<72x256xf32, #tpu.memory_space<vmem>>, vector<8x256xf32>,
    %c2_19 = arith.constant 2 : index
    %c0_20 = arith.constant 0 : index
    %c118_21 = arith.constant 118 : index
    %17 = vector.load %arg1[%c2_19, %c0_20, %c118_21] : memref<4x8x512xf32, #tpu.memory_space<vmem>>, vector<1x8x256xf32>
    %18 = vector.shape_cast %17 : vector<1x8x256xf32> to vector<8x256xf32>
    %c40 = arith.constant 40 : index
    %c0_22 = arith.constant 0 : index
    %19 = vector.load %arg14[%c40, %c0_22] : memref<72x256xf32, #tpu.memory_space<vmem>>, vector<8x256xf32>
    tpu.vector_store %arg14[%c40, %c0_22], %18 {strides = array<i32>} : memref<72x256xf32, #tpu.memory_space<vmem>>, vector<8x256xf32>,
    %c0_23 = arith.constant 0 : index
    %c0_24 = arith.constant 0 : index
    %c127 = arith.constant 127 : index
    %20 = vector.load %arg1[%c0_23, %c0_24, %c127] : memref<4x8x512xf32, #tpu.memory_space<vmem>>, vector<1x8x256xf32>
    %21 = vector.shape_cast %20 : vector<1x8x256xf32> to vector<8x256xf32>
    %c48 = arith.constant 48 : index
    %c0_25 = arith.constant 0 : index
    %22 = vector.load %arg14[%c48, %c0_25] : memref<72x256xf32, #tpu.memory_space<vmem>>, vector<8x256xf32>
    tpu.vector_store %arg14[%c48, %c0_25], %21 {strides = array<i32>} : memref<72x256xf32, #tpu.memory_space<vmem>>, vector<8x256xf32>,
    %c1_26 = arith.constant 1 : index
    %c0_27 = arith.constant 0 : index
    %c127_28 = arith.constant 127 : index
    %23 = vector.load %arg1[%c1_26, %c0_27, %c127_28] : memref<4x8x512xf32, #tpu.memory_space<vmem>>, vector<1x8x256xf32>
    %24 = vector.shape_cast %23 : vector<1x8x256xf32> to vector<8x256xf32>
    %c56 = arith.constant 56 : index
    %c0_29 = arith.constant 0 : index
    %25 = vector.load %arg14[%c56, %c0_29] : memref<72x256xf32, #tpu.memory_space<vmem>>, vector<8x256xf32>
    tpu.vector_store %arg14[%c56, %c0_29], %24 {strides = array<i32>} : memref<72x256xf32, #tpu.memory_space<vmem>>, vector<8x256xf32>,
    %c0_30 = arith.constant 0 : index
    %c0_31 = arith.constant 0 : index
    %c128 = arith.constant 128 : index
    %26 = vector.load %arg1[%c0_30, %c0_31, %c128] : memref<4x8x512xf32, #tpu.memory_space<vmem>>, vector<1x8x256xf32>
    %27 = vector.shape_cast %26 : vector<1x8x256xf32> to vector<8x256xf32>
    %c64 = arith.constant 64 : index
    %c0_32 = arith.constant 0 : index
    %28 = vector.load %arg14[%c64, %c0_32] : memref<72x256xf32, #tpu.memory_space<vmem>>, vector<8x256xf32>
    tpu.vector_store %arg14[%c64, %c0_32], %27 {strides = array<i32>} : memref<72x256xf32, #tpu.memory_space<vmem>>, vector<8x256xf32>,
    %c0_33 = arith.constant 0 : index
    %c0_34 = arith.constant 0 : index
    %29 = vector.load %arg4[%c0_33, %c0_34] : memref<8x72xf32, #tpu.memory_space<vmem>>, vector<8x72xf32>
    %c0_35 = arith.constant 0 : index
    %c0_36 = arith.constant 0 : index
    %30 = vector.load %arg14[%c0_35, %c0_36] : memref<72x256xf32, #tpu.memory_space<vmem>>, vector<72x256xf32>
    %cst = arith.constant dense<0.000000e+00> : vector<8x256xf32>
    %31 = tpu.matmul %29, %30, %cst {dimension_numbers = #tpu.dot_dimension_numbers<[1], [0], [0], [1], [0, 0, 1, 1], [], []>} : vector<8x72xf32>, vector<72x256xf32>, vector<8x256xf32> -> vector<8x256xf32>
    %cst_37 = arith.constant dense<0.000000e+00> : vector<8x1xf32>
    %32 = tpu.matmul %31, %1, %cst_37 {dimension_numbers = #tpu.dot_dimension_numbers<[1], [0], [0], [1], [0, 0, 1, 1], [], []>} : vector<8x256xf32>, vector<256x1xf32>, vector<8x1xf32> -> vector<8x1xf32>
    %33 = arith.mulf %31, %31 : vector<8x256xf32>
    %cst_38 = arith.constant dense<0.000000e+00> : vector<8x1xf32>
    %34 = tpu.matmul %33, %1, %cst_38 {dimension_numbers = #tpu.dot_dimension_numbers<[1], [0], [0], [1], [0, 0, 1, 1], [], []>} : vector<8x256xf32>, vector<256x1xf32>, vector<8x1xf32> -> vector<8x1xf32>
    %cst_39 = arith.constant 7.812500e-03 : f32
    %35 = vector.broadcast %cst_39 : f32 to vector<8x1xf32>
    %36 = arith.mulf %32, %35 : vector<8x1xf32>
    %cst_40 = arith.constant 7.812500e-03 : f32
    %37 = vector.broadcast %cst_40 : f32 to vector<8x1xf32>
    %38 = arith.mulf %34, %37 : vector<8x1xf32>
    %39 = arith.mulf %36, %36 : vector<8x1xf32>
    %40 = arith.subf %38, %39 : vector<8x1xf32>
    %41 = vector.broadcast %36 : vector<8x1xf32> to vector<8x256xf32>
    %42 = arith.subf %31, %41 : vector<8x256xf32>
    %cst_41 = arith.constant 9.99999974E-6 : f32
    %43 = vector.broadcast %cst_41 : f32 to vector<8x1xf32>
    %44 = arith.addf %40, %43 : vector<8x1xf32>
    %45 = math.rsqrt %44 : vector<8x1xf32>
    %46 = vector.broadcast %45 : vector<8x1xf32> to vector<8x256xf32>
    %47 = arith.mulf %42, %46 : vector<8x256xf32>
    %c0_42 = arith.constant 0 : index
    %c0_43 = arith.constant 0 : index
    %48 = vector.load %arg5[%c0_42, %c0_43] : memref<8x1xf32, #tpu.memory_space<vmem>>, vector<8x1xf32>
    %49 = vector.broadcast %48 : vector<8x1xf32> to vector<8x256xf32>
    %50 = arith.mulf %47, %49 : vector<8x256xf32>
    %c0_44 = arith.constant 0 : index
    %c0_45 = arith.constant 0 : index
    %51 = vector.load %arg6[%c0_44, %c0_45] : memref<8x1xf32, #tpu.memory_space<vmem>>, vector<8x1xf32>
    %52 = vector.broadcast %51 : vector<8x1xf32> to vector<8x256xf32>
    %53 = arith.addf %50, %52 : vector<8x256xf32>
    %cst_46 = arith.constant 0.000000e+00 : f32
    %54 = vector.broadcast %cst_46 : f32 to vector<8x256xf32>
    %55 = arith.maximumf %53, %54 : vector<8x256xf32>
    %56 = vector.broadcast %0 : vector<1x256xf32> to vector<8x256xf32>
    %57 = arith.mulf %55, %56 : vector<8x256xf32>
    %cst_47 = arith.constant 0.000000e+00 : f32
    %58 = vector.broadcast %cst_47 : f32 to vector<8x128xf32>
    %c0_48 = arith.constant 0 : index
    %c0_49 = arith.constant 0 : index
    %59 = vector.load %arg15[%c0_48, %c0_49] : memref<8x512xf32, #tpu.memory_space<vmem>>, vector<8x128xf32>
    tpu.vector_store %arg15[%c0_48, %c0_49], %58 {strides = array<i32>} : memref<8x512xf32, #tpu.memory_space<vmem>>, vector<8x128xf32>,
    %cst_50 = arith.constant 0.000000e+00 : f32
    %60 = vector.broadcast %cst_50 : f32 to vector<8x128xf32>
    %c0_51 = arith.constant 0 : index
    %c384 = arith.constant 384 : index
    %61 = vector.load %arg15[%c0_51, %c384] : memref<8x512xf32, #tpu.memory_space<vmem>>, vector<8x128xf32>
    tpu.vector_store %arg15[%c0_51, %c384], %60 {strides = array<i32>} : memref<8x512xf32, #tpu.memory_space<vmem>>, vector<8x128xf32>,
    %c0_52 = arith.constant 0 : index
    %c128_53 = arith.constant 128 : index
    %62 = vector.load %arg15[%c0_52, %c128_53] : memref<8x512xf32, #tpu.memory_space<vmem>>, vector<8x256xf32>
    tpu.vector_store %arg15[%c0_52, %c128_53], %57 {strides = array<i32>} : memref<8x512xf32, #tpu.memory_space<vmem>>, vector<8x256xf32>,
    %c0_54 = arith.constant 0 : index
    %c117_55 = arith.constant 117 : index
    %63 = vector.load %arg15[%c0_54, %c117_55] : memref<8x512xf32, #tpu.memory_space<vmem>>, vector<8x256xf32>
    %c0_56 = arith.constant 0 : index
    %c0_57 = arith.constant 0 : index
    %64 = vector.load %arg16[%c0_56, %c0_57] : memref<72x256xf32, #tpu.memory_space<vmem>>, vector<8x256xf32>
    tpu.vector_store %arg16[%c0_56, %c0_57], %63 {strides = array<i32>} : memref<72x256xf32, #tpu.memory_space<vmem>>, vector<8x256xf32>,
    %c0_58 = arith.constant 0 : index
    %c118_59 = arith.constant 118 : index
    %65 = vector.load %arg15[%c0_58, %c118_59] : memref<8x512xf32, #tpu.memory_space<vmem>>, vector<8x256xf32>
    %c8_60 = arith.constant 8 : index
    %c0_61 = arith.constant 0 : index
    %66 = vector.load %arg16[%c8_60, %c0_61] : memref<72x256xf32, #tpu.memory_space<vmem>>, vector<8x256xf32>
    tpu.vector_store %arg16[%c8_60, %c0_61], %65 {strides = array<i32>} : memref<72x256xf32, #tpu.memory_space<vmem>>, vector<8x256xf32>,
    %c0_62 = arith.constant 0 : index
    %c119 = arith.constant 119 : index
    %67 = vector.load %arg15[%c0_62, %c119] : memref<8x512xf32, #tpu.memory_space<vmem>>, vector<8x256xf32>
    %c16_63 = arith.constant 16 : index
    %c0_64 = arith.constant 0 : index
    %68 = vector.load %arg16[%c16_63, %c0_64] : memref<72x256xf32, #tpu.memory_space<vmem>>, vector<8x256xf32>
    tpu.vector_store %arg16[%c16_63, %c0_64], %67 {strides = array<i32>} : memref<72x256xf32, #tpu.memory_space<vmem>>, vector<8x256xf32>,
    %c0_65 = arith.constant 0 : index
    %c127_66 = arith.constant 127 : index
    %69 = vector.load %arg15[%c0_65, %c127_66] : memref<8x512xf32, #tpu.memory_space<vmem>>, vector<8x256xf32>
    %c24_67 = arith.constant 24 : index
    %c0_68 = arith.constant 0 : index
    %70 = vector.load %arg16[%c24_67, %c0_68] : memref<72x256xf32, #tpu.memory_space<vmem>>, vector<8x256xf32>
    tpu.vector_store %arg16[%c24_67, %c0_68], %69 {strides = array<i32>} : memref<72x256xf32, #tpu.memory_space<vmem>>, vector<8x256xf32>,
    %c0_69 = arith.constant 0 : index
    %c128_70 = arith.constant 128 : index
    %71 = vector.load %arg15[%c0_69, %c128_70] : memref<8x512xf32, #tpu.memory_space<vmem>>, vector<8x256xf32>
    %c32_71 = arith.constant 32 : index
    %c0_72 = arith.constant 0 : index
    %72 = vector.load %arg16[%c32_71, %c0_72] : memref<72x256xf32, #tpu.memory_space<vmem>>, vector<8x256xf32>
    tpu.vector_store %arg16[%c32_71, %c0_72], %71 {strides = array<i32>} : memref<72x256xf32, #tpu.memory_space<vmem>>, vector<8x256xf32>,
    %c0_73 = arith.constant 0 : index
    %c129 = arith.constant 129 : index
    %73 = vector.load %arg15[%c0_73, %c129] : memref<8x512xf32, #tpu.memory_space<vmem>>, vector<8x256xf32>
    %c40_74 = arith.constant 40 : index
    %c0_75 = arith.constant 0 : index
    %74 = vector.load %arg16[%c40_74, %c0_75] : memref<72x256xf32, #tpu.memory_space<vmem>>, vector<8x256xf32>
    tpu.vector_store %arg16[%c40_74, %c0_75], %73 {strides = array<i32>} : memref<72x256xf32, #tpu.memory_space<vmem>>, vector<8x256xf32>,
    %c0_76 = arith.constant 0 : index
    %c137 = arith.constant 137 : index
    %75 = vector.load %arg15[%c0_76, %c137] : memref<8x512xf32, #tpu.memory_space<vmem>>, vector<8x256xf32>
    %c48_77 = arith.constant 48 : index
    %c0_78 = arith.constant 0 : index
    %76 = vector.load %arg16[%c48_77, %c0_78] : memref<72x256xf32, #tpu.memory_space<vmem>>, vector<8x256xf32>
    tpu.vector_store %arg16[%c48_77, %c0_78], %75 {strides = array<i32>} : memref<72x256xf32, #tpu.memory_space<vmem>>, vector<8x256xf32>,
    %c0_79 = arith.constant 0 : index
    %c138 = arith.constant 138 : index
    %77 = vector.load %arg15[%c0_79, %c138] : memref<8x512xf32, #tpu.memory_space<vmem>>, vector<8x256xf32>
    %c56_80 = arith.constant 56 : index
    %c0_81 = arith.constant 0 : index
    %78 = vector.load %arg16[%c56_80, %c0_81] : memref<72x256xf32, #tpu.memory_space<vmem>>, vector<8x256xf32>
    tpu.vector_store %arg16[%c56_80, %c0_81], %77 {strides = array<i32>} : memref<72x256xf32, #tpu.memory_space<vmem>>, vector<8x256xf32>,
    %c0_82 = arith.constant 0 : index
    %c139 = arith.constant 139 : index
    %79 = vector.load %arg15[%c0_82, %c139] : memref<8x512xf32, #tpu.memory_space<vmem>>, vector<8x256xf32>
    %c64_83 = arith.constant 64 : index
    %c0_84 = arith.constant 0 : index
    %80 = vector.load %arg16[%c64_83, %c0_84] : memref<72x256xf32, #tpu.memory_space<vmem>>, vector<8x256xf32>
    tpu.vector_store %arg16[%c64_83, %c0_84], %79 {strides = array<i32>} : memref<72x256xf32, #tpu.memory_space<vmem>>, vector<8x256xf32>,
    %c0_85 = arith.constant 0 : index
    %c0_86 = arith.constant 0 : index
    %81 = vector.load %arg7[%c0_85, %c0_86] : memref<8x72xf32, #tpu.memory_space<vmem>>, vector<8x72xf32>
    %c0_87 = arith.constant 0 : index
    %c0_88 = arith.constant 0 : index
    %82 = vector.load %arg16[%c0_87, %c0_88] : memref<72x256xf32, #tpu.memory_space<vmem>>, vector<72x256xf32>
    %cst_89 = arith.constant dense<0.000000e+00> : vector<8x256xf32>
    %83 = tpu.matmul %81, %82, %cst_89 {dimension_numbers = #tpu.dot_dimension_numbers<[1], [0], [0], [1], [0, 0, 1, 1], [], []>} : vector<8x72xf32>, vector<72x256xf32>, vector<8x256xf32> -> vector<8x256xf32>
    %cst_90 = arith.constant dense<0.000000e+00> : vector<8x1xf32>
    %84 = tpu.matmul %83, %1, %cst_90 {dimension_numbers = #tpu.dot_dimension_numbers<[1], [0], [0], [1], [0, 0, 1, 1], [], []>} : vector<8x256xf32>, vector<256x1xf32>, vector<8x1xf32> -> vector<8x1xf32>
    %85 = arith.mulf %83, %83 : vector<8x256xf32>
    %cst_91 = arith.constant dense<0.000000e+00> : vector<8x1xf32>
    %86 = tpu.matmul %85, %1, %cst_91 {dimension_numbers = #tpu.dot_dimension_numbers<[1], [0], [0], [1], [0, 0, 1, 1], [], []>} : vector<8x256xf32>, vector<256x1xf32>, vector<8x1xf32> -> vector<8x1xf32>
    %cst_92 = arith.constant 7.812500e-03 : f32
    %87 = vector.broadcast %cst_92 : f32 to vector<8x1xf32>
    %88 = arith.mulf %84, %87 : vector<8x1xf32>
    %cst_93 = arith.constant 7.812500e-03 : f32
    %89 = vector.broadcast %cst_93 : f32 to vector<8x1xf32>
    %90 = arith.mulf %86, %89 : vector<8x1xf32>
    %91 = arith.mulf %88, %88 : vector<8x1xf32>
    %92 = arith.subf %90, %91 : vector<8x1xf32>
    %93 = vector.broadcast %88 : vector<8x1xf32> to vector<8x256xf32>
    %94 = arith.subf %83, %93 : vector<8x256xf32>
    %cst_94 = arith.constant 9.99999974E-6 : f32
    %95 = vector.broadcast %cst_94 : f32 to vector<8x1xf32>
    %96 = arith.addf %92, %95 : vector<8x1xf32>
    %97 = math.rsqrt %96 : vector<8x1xf32>
    %98 = vector.broadcast %97 : vector<8x1xf32> to vector<8x256xf32>
    %99 = arith.mulf %94, %98 : vector<8x256xf32>
    %c0_95 = arith.constant 0 : index
    %c0_96 = arith.constant 0 : index
    %100 = vector.load %arg8[%c0_95, %c0_96] : memref<8x1xf32, #tpu.memory_space<vmem>>, vector<8x1xf32>
    %101 = vector.broadcast %100 : vector<8x1xf32> to vector<8x256xf32>
    %102 = arith.mulf %99, %101 : vector<8x256xf32>
    %c0_97 = arith.constant 0 : index
    %c0_98 = arith.constant 0 : index
    %103 = vector.load %arg9[%c0_97, %c0_98] : memref<8x1xf32, #tpu.memory_space<vmem>>, vector<8x1xf32>
    %104 = vector.broadcast %103 : vector<8x1xf32> to vector<8x256xf32>
    %105 = arith.addf %102, %104 : vector<8x256xf32>
    %c3_99 = arith.constant 3 : index
    %c0_100 = arith.constant 0 : index
    %c117_101 = arith.constant 117 : index
    %106 = vector.load %arg1[%c3_99, %c0_100, %c117_101] : memref<4x8x512xf32, #tpu.memory_space<vmem>>, vector<1x8x256xf32>
    %107 = vector.shape_cast %106 : vector<1x8x256xf32> to vector<8x256xf32>
    %c0_102 = arith.constant 0 : index
    %c0_103 = arith.constant 0 : index
    %108 = vector.load %arg10[%c0_102, %c0_103] : memref<8x8xf32, #tpu.memory_space<vmem>>, vector<8x8xf32>
    %cst_104 = arith.constant dense<0.000000e+00> : vector<8x256xf32>
    %109 = tpu.matmul %108, %107, %cst_104 {dimension_numbers = #tpu.dot_dimension_numbers<[1], [0], [0], [1], [0, 0, 1, 1], [], []>} : vector<8x8xf32>, vector<8x256xf32>, vector<8x256xf32> -> vector<8x256xf32>
    %cst_105 = arith.constant dense<0.000000e+00> : vector<8x1xf32>
    %110 = tpu.matmul %109, %1, %cst_105 {dimension_numbers = #tpu.dot_dimension_numbers<[1], [0], [0], [1], [0, 0, 1, 1], [], []>} : vector<8x256xf32>, vector<256x1xf32>, vector<8x1xf32> -> vector<8x1xf32>
    %111 = arith.mulf %109, %109 : vector<8x256xf32>
    %cst_106 = arith.constant dense<0.000000e+00> : vector<8x1xf32>
    %112 = tpu.matmul %111, %1, %cst_106 {dimension_numbers = #tpu.dot_dimension_numbers<[1], [0], [0], [1], [0, 0, 1, 1], [], []>} : vector<8x256xf32>, vector<256x1xf32>, vector<8x1xf32> -> vector<8x1xf32>
    %cst_107 = arith.constant 7.812500e-03 : f32
    %113 = vector.broadcast %cst_107 : f32 to vector<8x1xf32>
    %114 = arith.mulf %110, %113 : vector<8x1xf32>
    %cst_108 = arith.constant 7.812500e-03 : f32
    %115 = vector.broadcast %cst_108 : f32 to vector<8x1xf32>
    %116 = arith.mulf %112, %115 : vector<8x1xf32>
    %117 = arith.mulf %114, %114 : vector<8x1xf32>
    %118 = arith.subf %116, %117 : vector<8x1xf32>
    %119 = vector.broadcast %114 : vector<8x1xf32> to vector<8x256xf32>
    %120 = arith.subf %109, %119 : vector<8x256xf32>
    %cst_109 = arith.constant 9.99999974E-6 : f32
    %121 = vector.broadcast %cst_109 : f32 to vector<8x1xf32>
    %122 = arith.addf %118, %121 : vector<8x1xf32>
    %123 = math.rsqrt %122 : vector<8x1xf32>
    %124 = vector.broadcast %123 : vector<8x1xf32> to vector<8x256xf32>
    %125 = arith.mulf %120, %124 : vector<8x256xf32>
    %c0_110 = arith.constant 0 : index
    %c0_111 = arith.constant 0 : index
    %126 = vector.load %arg11[%c0_110, %c0_111] : memref<8x1xf32, #tpu.memory_space<vmem>>, vector<8x1xf32>
    %127 = vector.broadcast %126 : vector<8x1xf32> to vector<8x256xf32>
    %128 = arith.mulf %125, %127 : vector<8x256xf32>
    %c0_112 = arith.constant 0 : index
    %c0_113 = arith.constant 0 : index
    %129 = vector.load %arg12[%c0_112, %c0_113] : memref<8x1xf32, #tpu.memory_space<vmem>>, vector<8x1xf32>
    %130 = vector.broadcast %129 : vector<8x1xf32> to vector<8x256xf32>
    %131 = arith.addf %128, %130 : vector<8x256xf32>
    %132 = arith.addf %105, %131 : vector<8x256xf32>
    %cst_114 = arith.constant 0.000000e+00 : f32
    %133 = vector.broadcast %cst_114 : f32 to vector<8x256xf32>
    %134 = arith.maximumf %132, %133 : vector<8x256xf32>
    %c0_115 = arith.constant 0 : index
    %c0_116 = arith.constant 0 : index
    %135 = vector.load %arg13[%c0_115, %c0_116] : memref<8x256xf32, #tpu.memory_space<vmem>>, vector<8x256xf32>
    tpu.vector_store %arg13[%c0_115, %c0_116], %134 {strides = array<i32>} : memref<8x256xf32, #tpu.memory_space<vmem>>, vector<8x256xf32>,
    return
  }
  func.func @transform_0(%arg0: i32) -> (i32, i32, i32) {
    %c0_i32 = arith.constant 0 : i32
    %c0_i32_0 = arith.constant 0 : i32
    %c0_i32_1 = arith.constant 0 : i32
    %c0_i32_2 = arith.constant 0 : i32
    return %c0_i32, %c0_i32_0, %c0_i32_1 : i32, i32, i32
  }
  func.func @transform_1(%arg0: i32) -> (i32, i32) {
    %c0_i32 = arith.constant 0 : i32
    %c0_i32_0 = arith.constant 0 : i32
    %c0_i32_1 = arith.constant 0 : i32
    return %c0_i32, %c0_i32_0 : i32, i32
  }
  func.func @transform_2(%arg0: i32) -> (i32, i32) {
    %c0_i32 = arith.constant 0 : i32
    %c0_i32_0 = arith.constant 0 : i32
    %c0_i32_1 = arith.constant 0 : i32
    return %c0_i32, %c0_i32_0 : i32, i32
  }
  func.func @transform_3(%arg0: i32) -> (i32, i32) {
    %c0_i32 = arith.constant 0 : i32
    %c0_i32_0 = arith.constant 0 : i32
    %c0_i32_1 = arith.constant 0 : i32
    return %c0_i32, %c0_i32_0 : i32, i32
  }
  func.func @transform_4(%arg0: i32) -> (i32, i32) {
    %c0_i32 = arith.constant 0 : i32
    %c0_i32_0 = arith.constant 0 : i32
    %c0_i32_1 = arith.constant 0 : i32
    return %c0_i32, %c0_i32_0 : i32, i32
  }
  func.func @transform_5(%arg0: i32) -> (i32, i32) {
    %c0_i32 = arith.constant 0 : i32
    %c0_i32_0 = arith.constant 0 : i32
    %c0_i32_1 = arith.constant 0 : i32
    return %c0_i32, %c0_i32_0 : i32, i32
  }
  func.func @transform_6(%arg0: i32) -> (i32, i32) {
    %c0_i32 = arith.constant 0 : i32
    %c0_i32_0 = arith.constant 0 : i32
    %c0_i32_1 = arith.constant 0 : i32
    return %c0_i32, %c0_i32_0 : i32, i32
  }
  func.func @transform_7(%arg0: i32) -> (i32, i32) {
    %c0_i32 = arith.constant 0 : i32
    %c0_i32_0 = arith.constant 0 : i32
    %c0_i32_1 = arith.constant 0 : i32
    return %c0_i32, %c0_i32_0 : i32, i32
  }
  func.func @transform_8(%arg0: i32) -> (i32, i32) {
    %c0_i32 = arith.constant 0 : i32
    %c0_i32_0 = arith.constant 0 : i32
    %c0_i32_1 = arith.constant 0 : i32
    return %c0_i32, %c0_i32_0 : i32, i32
  }
  func.func @transform_9(%arg0: i32) -> (i32, i32) {
    %c0_i32 = arith.constant 0 : i32
    %c0_i32_0 = arith.constant 0 : i32
    %c0_i32_1 = arith.constant 0 : i32
    return %c0_i32, %c0_i32_0 : i32, i32
  }
  func.func @transform_10(%arg0: i32) -> (i32, i32) {
    %c0_i32 = arith.constant 0 : i32
    %c0_i32_0 = arith.constant 0 : i32
    %c0_i32_1 = arith.constant 0 : i32
    return %c0_i32, %c0_i32_0 : i32, i32
  }
  func.func @transform_11(%arg0: i32) -> (i32, i32) {
    %c0_i32 = arith.constant 0 : i32
    %c0_i32_0 = arith.constant 0 : i32
    %c0_i32_1 = arith.constant 0 : i32
    return %c0_i32, %c0_i32_0 : i32, i32
  }
  func.func @transform_12(%arg0: i32) -> (i32, i32) {
    %c0_i32 = arith.constant 0 : i32
    %c0_i32_0 = arith.constant 0 : i32
    %c0_i32_1 = arith.constant 0 : i32
    return %c0_i32, %c0_i32_0 : i32, i32
  }
}

</mosaic_0001>

<llo_original>
// kernel: basic_block_forward.1
$region0: #{basic_block_forward.1}
  #allocation0 [shape = 'u32[]', space=smem, size = 0x4, offset = 0x4, fixed_abs, tag = 'smem constant byte address 0x4 - core index']
  #allocation1 [shape = 'u32[72,128]{1,0:T(1,128)}', space=vmem, size = 0x9000, scoped, tag = 'internal scratch']
  #allocation2 [shape = 'f32[72,256]{1,0:T(8,128)}', space=vmem, size = 0x12000, scoped, tag = 'scratch operand']
  #allocation3 [shape = 'f32[8,512]{1,0:T(8,128)}', space=vmem, size = 0x4000, scoped, tag = 'scratch operand']
  #allocation4 [shape = 'f32[72,256]{1,0:T(8,128)}', space=vmem, size = 0x12000, scoped, tag = 'scratch operand']
  %s0 = inlined_call_operand.vmem [shape: f32[4,8,512], index: 0, kind: input, shape index: {}]
  %s1 = inlined_call_operand.vmem [shape: f32[1,256], index: 1, kind: input, shape index: {}]
  %s2 = inlined_call_operand.vmem [shape: f32[256,1], index: 2, kind: input, shape index: {}]
  %s3 = inlined_call_operand.vmem [shape: f32[8,72], index: 3, kind: input, shape index: {}]
  %s4 = inlined_call_operand.vmem [shape: f32[8,1], index: 4, kind: input, shape index: {}]
  %s5 = inlined_call_operand.vmem [shape: f32[8,1], index: 5, kind: input, shape index: {}]
  %s6 = inlined_call_operand.vmem [shape: f32[8,72], index: 6, kind: input, shape index: {}]
  %s7 = inlined_call_operand.vmem [shape: f32[8,1], index: 7, kind: input, shape index: {}]
  %s8 = inlined_call_operand.vmem [shape: f32[8,1], index: 8, kind: input, shape index: {}]
  %s9 = inlined_call_operand.vmem [shape: f32[8,8], index: 9, kind: input, shape index: {}]
  %s10 = inlined_call_operand.vmem [shape: f32[8,1], index: 10, kind: input, shape index: {}]
  %s11 = inlined_call_operand.vmem [shape: f32[8,1], index: 11, kind: input, shape index: {}]
  %s12 = inlined_call_operand.vmem [shape: f32[8,256], index: 12, kind: output, shape index: {}]
  %s13 = sld [smem:[#allocation0]]
  $region58: #{basic_block_forward.1} parent=0
    _
  %s15 = ssub.s32 1, %s13
  %s16 = scalar_select 0, %s15, %s13
  // Predicated region
  $region2: #{basic_block_forward.1} parent=0 // pred_check
    _
  $region3: #{basic_block_forward.1} parent=0 // pred_check_branch
    %18 = sbr.rel (0) target = $region5
  $region4: #{basic_block_forward.1} parent=0 // pred_region
    _
  $region5: #{basic_block_forward.1} parent=0 // pred_fallthru
    _
  // Predicated region
  $region6: #{basic_block_forward.1} parent=0 // pred_check
    _
  $region7: #{basic_block_forward.1} parent=0 // pred_check_branch
    %20 = sbr.rel (0) target = $region9
  $region8: #{basic_block_forward.1} parent=0 // pred_region
    _
  $region9: #{basic_block_forward.1} parent=0 // pred_fallthru
    _
  // Predicated region
  $region10: #{basic_block_forward.1} parent=0 // pred_check
    _
  $region11: #{basic_block_forward.1} parent=0 // pred_check_branch
    %22 = sbr.rel (0) target = $region13
  $region12: #{basic_block_forward.1} parent=0 // pred_region
    _
  $region13: #{basic_block_forward.1} parent=0 // pred_fallthru
    _
  // Predicated region
  $region14: #{basic_block_forward.1} parent=0 // pred_check
    _
  $region15: #{basic_block_forward.1} parent=0 // pred_check_branch
    %24 = sbr.rel (0) target = $region17
  $region16: #{basic_block_forward.1} parent=0 // pred_region
    _
  $region17: #{basic_block_forward.1} parent=0 // pred_fallthru
    _
  // Predicated region
  $region18: #{basic_block_forward.1} parent=0 // pred_check
    _
  $region19: #{basic_block_forward.1} parent=0 // pred_check_branch
    %26 = sbr.rel (0) target = $region21
  $region20: #{basic_block_forward.1} parent=0 // pred_region
    _
  $region21: #{basic_block_forward.1} parent=0 // pred_fallthru
    _
  // Predicated region
  $region22: #{basic_block_forward.1} parent=0 // pred_check
    _
  $region23: #{basic_block_forward.1} parent=0 // pred_check_branch
    %28 = sbr.rel (0) target = $region25
  $region24: #{basic_block_forward.1} parent=0 // pred_region
    _
  $region25: #{basic_block_forward.1} parent=0 // pred_fallthru
    _
  // Predicated region
  $region26: #{basic_block_forward.1} parent=0 // pred_check
    _
  $region27: #{basic_block_forward.1} parent=0 // pred_check_branch
    %30 = sbr.rel (0) target = $region29
  $region28: #{basic_block_forward.1} parent=0 // pred_region
    _
  $region29: #{basic_block_forward.1} parent=0 // pred_fallthru
    _
  // Predicated region
  $region30: #{basic_block_forward.1} parent=0 // pred_check
    _
  $region31: #{basic_block_forward.1} parent=0 // pred_check_branch
    %32 = sbr.rel (0) target = $region33
  $region32: #{basic_block_forward.1} parent=0 // pred_region
    _
  $region33: #{basic_block_forward.1} parent=0 // pred_fallthru
    _
  // Predicated region
  $region34: #{basic_block_forward.1} parent=0 // pred_check
    _
  $region35: #{basic_block_forward.1} parent=0 // pred_check_branch
    %34 = sbr.rel (0) target = $region37
  $region36: #{basic_block_forward.1} parent=0 // pred_region
    _
  $region37: #{basic_block_forward.1} parent=0 // pred_fallthru
    _
  // Predicated region
  $region38: #{basic_block_forward.1} parent=0 // pred_check
    _
  $region39: #{basic_block_forward.1} parent=0 // pred_check_branch
    %36 = sbr.rel (0) target = $region41
  $region40: #{basic_block_forward.1} parent=0 // pred_region
    _
  $region41: #{basic_block_forward.1} parent=0 // pred_fallthru
    _
  // Predicated region
  $region42: #{basic_block_forward.1} parent=0 // pred_check
    _
  $region43: #{basic_block_forward.1} parent=0 // pred_check_branch
    %38 = sbr.rel (0) target = $region45
  $region44: #{basic_block_forward.1} parent=0 // pred_region
    _
  $region45: #{basic_block_forward.1} parent=0 // pred_fallthru
    _
  // Predicated region
  $region46: #{basic_block_forward.1} parent=0 // pred_check
    _
  $region47: #{basic_block_forward.1} parent=0 // pred_check_branch
    %40 = sbr.rel (0) target = $region49
  $region48: #{basic_block_forward.1} parent=0 // pred_region
    _
  $region49: #{basic_block_forward.1} parent=0 // pred_fallthru
    _
  %v41 = vld [vmem:[%s1] sm:$0x3]
  %v42 = vld [vmem:[%s2] sm:$0xff]
  %v43 = vld [vmem:[%s2 + $0x8] sm:$0xff]
  %v44 = vld [vmem:[%s2 + $0x10] sm:$0xff]
  %v45 = vld [vmem:[%s2 + $0x18] sm:$0xff]
  %v46 = vld [vmem:[%s2 + $0x20] sm:$0xff]
  %v47 = vld [vmem:[%s2 + $0x28] sm:$0xff]
  %v48 = vld [vmem:[%s2 + $0x30] sm:$0xff]
  %v49 = vld [vmem:[%s2 + $0x38] sm:$0xff]
  %v50 = vld [vmem:[%s2 + $0x40] sm:$0xff]
  %v51 = vld [vmem:[%s2 + $0x48] sm:$0xff]
  %v52 = vld [vmem:[%s2 + $0x50] sm:$0xff]
  %v53 = vld [vmem:[%s2 + $0x58] sm:$0xff]
  %v54 = vld [vmem:[%s2 + $0x60] sm:$0xff]
  %v55 = vld [vmem:[%s2 + $0x68] sm:$0xff]
  %v56 = vld [vmem:[%s2 + $0x70] sm:$0xff]
  %v57 = vld [vmem:[%s2 + $0x78] sm:$0xff]
  %v58 = vld [vmem:[%s2 + $0x80] sm:$0xff]
  %v59 = vld [vmem:[%s2 + $0x88] sm:$0xff]
  %v60 = vld [vmem:[%s2 + $0x90] sm:$0xff]
  %v61 = vld [vmem:[%s2 + $0x98] sm:$0xff]
  %v62 = vld [vmem:[%s2 + $0xa0] sm:$0xff]
  %v63 = vld [vmem:[%s2 + $0xa8] sm:$0xff]
  %v64 = vld [vmem:[%s2 + $0xb0] sm:$0xff]
  %v65 = vld [vmem:[%s2 + $0xb8] sm:$0xff]
  %v66 = vld [vmem:[%s2 + $0xc0] sm:$0xff]
  %v67 = vld [vmem:[%s2 + $0xc8] sm:$0xff]
  %v68 = vld [vmem:[%s2 + $0xd0] sm:$0xff]
  %v69 = vld [vmem:[%s2 + $0xd8] sm:$0xff]
  %v70 = vld [vmem:[%s2 + $0xe0] sm:$0xff]
  %v71 = vld [vmem:[%s2 + $0xe8] sm:$0xff]
  %v72 = vld [vmem:[%s2 + $0xf0] sm:$0xff]
  %v73 = vld [vmem:[%s2 + $0xf8] sm:$0xff]
  %v74 = vld [vmem:[%s0] sm:$0xff]
  %v75 = vld [vmem:[%s0 + $0x8] sm:$0xff]
  %v76 = vld [vmem:[%s0 + $0x10] sm:$0xff]
  %80 = vrot.lane.b32.xlu0 %v74, 11
  %v81 = vpop.permute.xlu0 %80
  %82 = vrot.lane.b32.xlu0 %v75, 11
  %v83 = vpop.permute.xlu0 %82
  %84 = vrot.lane.b32.xlu0 %v76, 11
  %v85 = vpop.permute.xlu0 %84
  %vm86 = vcmask 89088
  %v87 = vsel %vm86, %v81, %v83
  %v88 = vsel %vm86, %v83, %v85
  %91 = vst [vmem:[#allocation2] sm:$0xff] %v87
  %92 = vst [vmem:[#allocation2 + $0x8] sm:$0xff] %v88
  %s93 = scalar_lea.vmem %s0, 32
  %v94 = vld [vmem:[%s93] sm:$0xff]
  %v95 = vld [vmem:[%s93 + $0x8] sm:$0xff]
  %v96 = vld [vmem:[%s93 + $0x10] sm:$0xff]
  %100 = vrot.lane.b32.xlu0 %v94, 11
  %v101 = vpop.permute.xlu0 %100
  %102 = vrot.lane.b32.xlu0 %v95, 11
  %v103 = vpop.permute.xlu0 %102
  %104 = vrot.lane.b32.xlu0 %v96, 11
  %v105 = vpop.permute.xlu0 %104
  %v106 = vsel %vm86, %v101, %v103
  %v107 = vsel %vm86, %v103, %v105
  %110 = vst [vmem:[#allocation2 + $0x10] sm:$0xff] %v106
  %111 = vst [vmem:[#allocation2 + $0x18] sm:$0xff] %v107
  %v112 = vld [vmem:[%s0] sm:$0xff]
  %v113 = vld [vmem:[%s0 + $0x8] sm:$0xff]
  %v114 = vld [vmem:[%s0 + $0x10] sm:$0xff]
  %118 = vrot.lane.b32.xlu0 %v112, 10
  %v119 = vpop.permute.xlu0 %118
  %120 = vrot.lane.b32.xlu0 %v113, 10
  %v121 = vpop.permute.xlu0 %120
  %122 = vrot.lane.b32.xlu0 %v114, 10
  %v123 = vpop.permute.xlu0 %122
  %vm124 = vcmask 80896
  %v125 = vsel %vm124, %v119, %v121
  %v126 = vsel %vm124, %v121, %v123
  %129 = vst [vmem:[#allocation2 + $0x20] sm:$0xff] %v125
  %130 = vst [vmem:[#allocation2 + $0x28] sm:$0xff] %v126
  %s131 = scalar_lea.vmem %s0, 64
  %v132 = vld [vmem:[%s131] sm:$0xff]
  %v133 = vld [vmem:[%s131 + $0x8] sm:$0xff]
  %v134 = vld [vmem:[%s131 + $0x10] sm:$0xff]
  %138 = vrot.lane.b32.xlu0 %v132, 11
  %v139 = vpop.permute.xlu0 %138
  %140 = vrot.lane.b32.xlu0 %v133, 11
  %v141 = vpop.permute.xlu0 %140
  %142 = vrot.lane.b32.xlu0 %v134, 11
  %v143 = vpop.permute.xlu0 %142
  %v144 = vsel %vm86, %v139, %v141
  %v145 = vsel %vm86, %v141, %v143
  %148 = vst [vmem:[#allocation2 + $0x30] sm:$0xff] %v144
  %149 = vst [vmem:[#allocation2 + $0x38] sm:$0xff] %v145
  %s150 = scalar_lea.vmem %s0, 96
  %v151 = vld [vmem:[%s150] sm:$0xff]
  %v152 = vld [vmem:[%s150 + $0x8] sm:$0xff]
  %v153 = vld [vmem:[%s150 + $0x10] sm:$0xff]
  %157 = vrot.lane.b32.xlu0 %v151, 11
  %v158 = vpop.permute.xlu0 %157
  %159 = vrot.lane.b32.xlu0 %v152, 11
  %v160 = vpop.permute.xlu0 %159
  %161 = vrot.lane.b32.xlu0 %v153, 11
  %v162 = vpop.permute.xlu0 %161
  %v163 = vsel %vm86, %v158, %v160
  %v164 = vsel %vm86, %v160, %v162
  %167 = vst [vmem:[#allocation2 + $0x40] sm:$0xff] %v163
  %168 = vst [vmem:[#allocation2 + $0x48] sm:$0xff] %v164
  %v169 = vld [vmem:[%s131] sm:$0xff]
  %v170 = vld [vmem:[%s131 + $0x8] sm:$0xff]
  %v171 = vld [vmem:[%s131 + $0x10] sm:$0xff]
  %175 = vrot.lane.b32.xlu0 %v169, 10
  %v176 = vpop.permute.xlu0 %175
  %177 = vrot.lane.b32.xlu0 %v170, 10
  %v178 = vpop.permute.xlu0 %177
  %179 = vrot.lane.b32.xlu0 %v171, 10
  %v180 = vpop.permute.xlu0 %179
  %v181 = vsel %vm124, %v176, %v178
  %v182 = vsel %vm124, %v178, %v180
  %185 = vst [vmem:[#allocation2 + $0x50] sm:$0xff] %v181
  %186 = vst [vmem:[#allocation2 + $0x58] sm:$0xff] %v182
  %v187 = vld [vmem:[%s0] sm:$0xff]
  %v188 = vld [vmem:[%s0 + $0x8] sm:$0xff]
  %v189 = vld [vmem:[%s0 + $0x10] sm:$0xff]
  %193 = vrot.lane.b32.xlu0 %v187, 1
  %v194 = vpop.permute.xlu0 %193
  %195 = vrot.lane.b32.xlu0 %v188, 1
  %v196 = vpop.permute.xlu0 %195
  %197 = vrot.lane.b32.xlu0 %v189, 1
  %v198 = vpop.permute.xlu0 %197
  %vm199 = vcmask 7168
  %v200 = vsel %vm199, %v194, %v196
  %v201 = vsel %vm199, %v196, %v198
  %204 = vst [vmem:[#allocation2 + $0x60] sm:$0xff] %v200
  %205 = vst [vmem:[#allocation2 + $0x68] sm:$0xff] %v201
  %v206 = vld [vmem:[%s93] sm:$0xff]
  %v207 = vld [vmem:[%s93 + $0x8] sm:$0xff]
  %v208 = vld [vmem:[%s93 + $0x10] sm:$0xff]
  %212 = vrot.lane.b32.xlu0 %v206, 1
  %v213 = vpop.permute.xlu0 %212
  %214 = vrot.lane.b32.xlu0 %v207, 1
  %v215 = vpop.permute.xlu0 %214
  %216 = vrot.lane.b32.xlu0 %v208, 1
  %v217 = vpop.permute.xlu0 %216
  %v218 = vsel %vm199, %v213, %v215
  %v219 = vsel %vm199, %v215, %v217
  %222 = vst [vmem:[#allocation2 + $0x70] sm:$0xff] %v218
  %223 = vst [vmem:[#allocation2 + $0x78] sm:$0xff] %v219
  %v224 = vld [vmem:[%s0 + $0x8] sm:$0xff]
  %v225 = vld [vmem:[%s0 + $0x10] sm:$0xff]
  %226 = vst [vmem:[#allocation2 + $0x80] sm:$0xff] %v224
  %227 = vst [vmem:[#allocation2 + $0x88] sm:$0xff] %v225
  %v228 = vld [vmem:[%s3] sm:$0xff]
  %v229 = vld [vmem:[#allocation2] sm:$0xff]
  %v230 = vld [vmem:[#allocation2 + $0x8] sm:$0xff]
  %v231 = vld [vmem:[#allocation2 + $0x10] sm:$0xff]
  %v232 = vld [vmem:[#allocation2 + $0x18] sm:$0xff]
  %v233 = vld [vmem:[#allocation2 + $0x20] sm:$0xff]
  %v234 = vld [vmem:[#allocation2 + $0x28] sm:$0xff]
  %v235 = vld [vmem:[#allocation2 + $0x30] sm:$0xff]
  %v236 = vld [vmem:[#allocation2 + $0x38] sm:$0xff]
  %v237 = vld [vmem:[#allocation2 + $0x40] sm:$0xff]
  %v238 = vld [vmem:[#allocation2 + $0x48] sm:$0xff]
  %v239 = vld [vmem:[#allocation2 + $0x50] sm:$0xff]
  %v240 = vld [vmem:[#allocation2 + $0x58] sm:$0xff]
  %v241 = vld [vmem:[#allocation2 + $0x60] sm:$0xff]
  %v242 = vld [vmem:[#allocation2 + $0x68] sm:$0xff]
  %v243 = vld [vmem:[#allocation2 + $0x70] sm:$0xff]
  %v244 = vld [vmem:[#allocation2 + $0x78] sm:$0xff]
  %v245 = vld [vmem:[#allocation2 + $0x80] sm:$0xff]
  %v246 = vld [vmem:[#allocation2 + $0x88] sm:$0xff]
  %vm247 = vcmask 588800
  %v249 = vsel %vm247, %v228, 0
  %251 = vmatpush.msra.mxu0 0.0
  %252 = vmatpush.msra.mxu0 0.0
  %253 = vmatpush.msra.mxu0 0.0
  %254 = vmatpush.msra.mxu0 0.0
  %255 = vmatpush.msra.mxu0 0.0
  %256 = vmatpush.msra.mxu0 0.0
  %257 = vmatpush.msra.mxu0 0.0
  %258 = vmatpush.msra.mxu0 %v245
  %259 = vmatpush.msra.mxu0 %v243
  %260 = vmatpush.msra.mxu0 %v241
  %261 = vmatpush.msra.mxu0 %v239
  %262 = vmatpush.msra.mxu0 %v237
  %263 = vmatpush.msra.mxu0 %v235
  %264 = vmatpush.msra.mxu0 %v233
  %265 = vmatpush.msra.mxu0 %v231
  %266 = vmatpush.msra.mxu0 %v229
  %267 = vmatmul.f32.gmra.mxu0 %v249
  %v268 = vpop.f32.mrf.mxu0
  %v269 = vadd.f32 0.0, %v268
  %270 = vdwg.mxu0
  %271 = vmatpush.msra.mxu0 0.0
  %272 = vmatpush.msra.mxu0 0.0
  %273 = vmatpush.msra.mxu0 0.0
  %274 = vmatpush.msra.mxu0 0.0
  %275 = vmatpush.msra.mxu0 0.0
  %276 = vmatpush.msra.mxu0 0.0
  %277 = vmatpush.msra.mxu0 0.0
  %278 = vmatpush.msra.mxu0 %v246
  %279 = vmatpush.msra.mxu0 %v244
  %280 = vmatpush.msra.mxu0 %v242
  %281 = vmatpush.msra.mxu0 %v240
  %282 = vmatpush.msra.mxu0 %v238
  %283 = vmatpush.msra.mxu0 %v236
  %284 = vmatpush.msra.mxu0 %v234
  %285 = vmatpush.msra.mxu0 %v232
  %286 = vmatpush.msra.mxu0 %v230
  %287 = vmatmul.f32.gmra.mxu0 %v249
  %v288 = vpop.f32.mrf.mxu0
  %v289 = vadd.f32 0.0, %v288
  %290 = vdwg.mxu0
  %291 = vmatpush.msra.mxu0 %v57
  %292 = vmatpush.msra.mxu0 %v56
  %293 = vmatpush.msra.mxu0 %v55
  %294 = vmatpush.msra.mxu0 %v54
  %295 = vmatpush.msra.mxu0 %v53
  %296 = vmatpush.msra.mxu0 %v52
  %297 = vmatpush.msra.mxu0 %v51
  %298 = vmatpush.msra.mxu0 %v50
  %299 = vmatpush.msra.mxu0 %v49
  %300 = vmatpush.msra.mxu0 %v48
  %301 = vmatpush.msra.mxu0 %v47
  %302 = vmatpush.msra.mxu0 %v46
  %303 = vmatpush.msra.mxu0 %v45
  %304 = vmatpush.msra.mxu0 %v44
  %305 = vmatpush.msra.mxu0 %v43
  %306 = vmatpush.msra.mxu0 %v42
  %307 = vmatmul.f32.gmra.mxu0 %v269
  %v308 = vpop.f32.mrf.mxu0
  %v309 = vadd.f32 0.0, %v308
  %310 = vdwg.mxu0
  %311 = vmatpush.msra.mxu0 %v73
  %312 = vmatpush.msra.mxu0 %v72
  %313 = vmatpush.msra.mxu0 %v71
  %314 = vmatpush.msra.mxu0 %v70
  %315 = vmatpush.msra.mxu0 %v69
  %316 = vmatpush.msra.mxu0 %v68
  %317 = vmatpush.msra.mxu0 %v67
  %318 = vmatpush.msra.mxu0 %v66
  %319 = vmatpush.msra.mxu0 %v65
  %320 = vmatpush.msra.mxu0 %v64
  %321 = vmatpush.msra.mxu0 %v63
  %322 = vmatpush.msra.mxu0 %v62
  %323 = vmatpush.msra.mxu0 %v61
  %324 = vmatpush.msra.mxu0 %v60
  %325 = vmatpush.msra.mxu0 %v59
  %326 = vmatpush.msra.mxu0 %v58
  %327 = vmatmul.f32.gmra.mxu0 %v289
  %v328 = vpop.f32.mrf.mxu0
  %v329 = vadd.f32 %v309, %v328
  %330 = vdwg.mxu0
  %v331 = vmul.f32 %v269, %v269
  %v332 = vmul.f32 %v289, %v289
  %333 = vmatpush.msra.mxu0 %v57
  %334 = vmatpush.msra.mxu0 %v56
  %335 = vmatpush.msra.mxu0 %v55
  %336 = vmatpush.msra.mxu0 %v54
  %337 = vmatpush.msra.mxu0 %v53
  %338 = vmatpush.msra.mxu0 %v52
  %339 = vmatpush.msra.mxu0 %v51
  %340 = vmatpush.msra.mxu0 %v50
  %341 = vmatpush.msra.mxu0 %v49
  %342 = vmatpush.msra.mxu0 %v48
  %343 = vmatpush.msra.mxu0 %v47
  %344 = vmatpush.msra.mxu0 %v46
  %345 = vmatpush.msra.mxu0 %v45
  %346 = vmatpush.msra.mxu0 %v44
  %347 = vmatpush.msra.mxu0 %v43
  %348 = vmatpush.msra.mxu0 %v42
  %349 = vmatmul.f32.gmra.mxu0 %v331
  %v350 = vpop.f32.mrf.mxu0
  %v351 = vadd.f32 0.0, %v350
  %352 = vdwg.mxu0
  %353 = vmatpush.msra.mxu0 %v73
  %354 = vmatpush.msra.mxu0 %v72
  %355 = vmatpush.msra.mxu0 %v71
  %356 = vmatpush.msra.mxu0 %v70
  %357 = vmatpush.msra.mxu0 %v69
  %358 = vmatpush.msra.mxu0 %v68
  %359 = vmatpush.msra.mxu0 %v67
  %360 = vmatpush.msra.mxu0 %v66
  %361 = vmatpush.msra.mxu0 %v65
  %362 = vmatpush.msra.mxu0 %v64
  %363 = vmatpush.msra.mxu0 %v63
  %364 = vmatpush.msra.mxu0 %v62
  %365 = vmatpush.msra.mxu0 %v61
  %366 = vmatpush.msra.mxu0 %v60
  %367 = vmatpush.msra.mxu0 %v59
  %368 = vmatpush.msra.mxu0 %v58
  %369 = vmatmul.f32.gmra.mxu0 %v332
  %v370 = vpop.f32.mrf.mxu0
  %v371 = vadd.f32 %v351, %v370
  %372 = vdwg.mxu0
  %v373 = vmul.f32 %v329, 0.0078125
  %v374 = vmul.f32 %v371, 0.0078125
  %v375 = vmul.f32 %v373, %v373
  %v376 = vsub.f32 %v374, %v375
  %378 = vset.pattern.permute.xlu0 0
  %379 = vperm.xlu0 %378, %v373
  %v380 = vpop.permute.xlu0 %379
  %v382 = vsub.f32 %v269, %v380
  %v383 = vsub.f32 %v289, %v380
  %v384 = vadd.f32 %v376, 1e-05
  %v385 = vrsqrt.pop %v384
  %v386 = vmul.f32 %v385, %v384
  %v387 = vmul.f32 %v386, %v385
  %v388 = vmul.f32 0.5, %v387
  %v389 = vsub.f32 1.5, %v388
  %v390 = vmul.f32 %v385, %v389
  %vm391 = vweird.f32 %v384
  %vm392 = vweird.f32 %v385
  %vm393 = vmor %vm391, %vm392
  %v394 = vsel %vm393, %v385, %v390
  %396 = vset.pattern.permute.xlu0 0
  %397 = vperm.xlu0 %396, %v394
  %v398 = vpop.permute.xlu0 %397
  %v400 = vmul.f32 %v382, %v398
  %v401 = vmul.f32 %v383, %v398
  %v402 = vld [vmem:[%s4] sm:$0xff]
  %404 = vset.pattern.permute.xlu0 0
  %405 = vperm.xlu0 %404, %v402
  %v406 = vpop.permute.xlu0 %405
  %v408 = vmul.f32 %v400, %v406
  %v409 = vmul.f32 %v401, %v406
  %v410 = vld [vmem:[%s5] sm:$0xff]
  %412 = vset.pattern.permute.xlu0 0
  %413 = vperm.xlu0 %412, %v410
  %v414 = vpop.permute.xlu0 %413
  %v416 = vadd.f32 %v408, %v414
  %v417 = vadd.f32 %v409, %v414
  %v418 = vmax.f32 %v416, 0.0
  %v419 = vmax.f32 %v417, 0.0
  %v421 = vperm.slane %v41, 0
  %v422 = vperm.slane %v41, 1
  %v425 = vmul.f32 %v418, %v421
  %v426 = vmul.f32 %v419, %v422
  %427 = vst [vmem:[#allocation3] sm:$0xff] 0.0
  %428 = vst [vmem:[#allocation3 + $0x18] sm:$0xff] 0.0
  %429 = vst [vmem:[#allocation3 + $0x8] sm:$0xff] %v425
  %430 = vst [vmem:[#allocation3 + $0x10] sm:$0xff] %v426
  %v431 = vld [vmem:[#allocation3] sm:$0xff]
  %v432 = vld [vmem:[#allocation3 + $0x8] sm:$0xff]
  %v433 = vld [vmem:[#allocation3 + $0x10] sm:$0xff]
  %437 = vrot.lane.b32.xlu0 %v431, 11
  %v438 = vpop.permute.xlu0 %437
  %439 = vrot.lane.b32.xlu0 %v432, 11
  %v440 = vpop.permute.xlu0 %439
  %441 = vrot.lane.b32.xlu0 %v433, 11
  %v442 = vpop.permute.xlu0 %441
  %v443 = vsel %vm86, %v438, %v440
  %v444 = vsel %vm86, %v440, %v442
  %447 = vst [vmem:[#allocation4] sm:$0xff] %v443
  %448 = vst [vmem:[#allocation4 + $0x8] sm:$0xff] %v444
  %v449 = vld [vmem:[#allocation3] sm:$0xff]
  %v450 = vld [vmem:[#allocation3 + $0x8] sm:$0xff]
  %v451 = vld [vmem:[#allocation3 + $0x10] sm:$0xff]
  %455 = vrot.lane.b32.xlu0 %v449, 10
  %v456 = vpop.permute.xlu0 %455
  %457 = vrot.lane.b32.xlu0 %v450, 10
  %v458 = vpop.permute.xlu0 %457
  %459 = vrot.lane.b32.xlu0 %v451, 10
  %v460 = vpop.permute.xlu0 %459
  %v461 = vsel %vm124, %v456, %v458
  %v462 = vsel %vm124, %v458, %v460
  %465 = vst [vmem:[#allocation4 + $0x10] sm:$0xff] %v461
  %466 = vst [vmem:[#allocation4 + $0x18] sm:$0xff] %v462
  %v467 = vld [vmem:[#allocation3] sm:$0xff]
  %v468 = vld [vmem:[#allocation3 + $0x8] sm:$0xff]
  %v469 = vld [vmem:[#allocation3 + $0x10] sm:$0xff]
  %473 = vrot.lane.b32.xlu0 %v467, 9
  %v474 = vpop.permute.xlu0 %473
  %475 = vrot.lane.b32.xlu0 %v468, 9
  %v476 = vpop.permute.xlu0 %475
  %477 = vrot.lane.b32.xlu0 %v469, 9
  %v478 = vpop.permute.xlu0 %477
  %vm479 = vcmask 72704
  %v480 = vsel %vm479, %v474, %v476
  %v481 = vsel %vm479, %v476, %v478
  %484 = vst [vmem:[#allocation4 + $0x20] sm:$0xff] %v480
  %485 = vst [vmem:[#allocation4 + $0x28] sm:$0xff] %v481
  %v486 = vld [vmem:[#allocation3] sm:$0xff]
  %v487 = vld [vmem:[#allocation3 + $0x8] sm:$0xff]
  %v488 = vld [vmem:[#allocation3 + $0x10] sm:$0xff]
  %492 = vrot.lane.b32.xlu0 %v486, 1
  %v493 = vpop.permute.xlu0 %492
  %494 = vrot.lane.b32.xlu0 %v487, 1
  %v495 = vpop.permute.xlu0 %494
  %496 = vrot.lane.b32.xlu0 %v488, 1
  %v497 = vpop.permute.xlu0 %496
  %v498 = vsel %vm199, %v493, %v495
  %v499 = vsel %vm199, %v495, %v497
  %502 = vst [vmem:[#allocation4 + $0x30] sm:$0xff] %v498
  %503 = vst [vmem:[#allocation4 + $0x38] sm:$0xff] %v499
  %v504 = vld [vmem:[#allocation3 + $0x8] sm:$0xff]
  %v505 = vld [vmem:[#allocation3 + $0x10] sm:$0xff]
  %506 = vst [vmem:[#allocation4 + $0x40] sm:$0xff] %v504
  %507 = vst [vmem:[#allocation4 + $0x48] sm:$0xff] %v505
  %v508 = vld [vmem:[#allocation3 + $0x8] sm:$0xff]
  %v509 = vld [vmem:[#allocation3 + $0x10] sm:$0xff]
  %v510 = vld [vmem:[#allocation3 + $0x18] sm:$0xff]
  %514 = vrot.lane.b32.xlu0 %v508, 127
  %v515 = vpop.permute.xlu0 %514
  %516 = vrot.lane.b32.xlu0 %v509, 127
  %v517 = vpop.permute.xlu0 %516
  %518 = vrot.lane.b32.xlu0 %v510, 127
  %v519 = vpop.permute.xlu0 %518
  %vm520 = vcmask 1039360
  %v521 = vsel %vm520, %v515, %v517
  %v522 = vsel %vm520, %v517, %v519
  %525 = vst [vmem:[#allocation4 + $0x50] sm:$0xff] %v521
  %526 = vst [vmem:[#allocation4 + $0x58] sm:$0xff] %v522
  %v527 = vld [vmem:[#allocation3 + $0x8] sm:$0xff]
  %v528 = vld [vmem:[#allocation3 + $0x10] sm:$0xff]
  %v529 = vld [vmem:[#allocation3 + $0x18] sm:$0xff]
  %533 = vrot.lane.b32.xlu0 %v527, 119
  %v534 = vpop.permute.xlu0 %533
  %535 = vrot.lane.b32.xlu0 %v528, 119
  %v536 = vpop.permute.xlu0 %535
  %537 = vrot.lane.b32.xlu0 %v529, 119
  %v538 = vpop.permute.xlu0 %537
  %vm539 = vcmask 973824
  %v540 = vsel %vm539, %v534, %v536
  %v541 = vsel %vm539, %v536, %v538
  %544 = vst [vmem:[#allocation4 + $0x60] sm:$0xff] %v540
  %545 = vst [vmem:[#allocation4 + $0x68] sm:$0xff] %v541
  %v546 = vld [vmem:[#allocation3 + $0x8] sm:$0xff]
  %v547 = vld [vmem:[#allocation3 + $0x10] sm:$0xff]
  %v548 = vld [vmem:[#allocation3 + $0x18] sm:$0xff]
  %552 = vrot.lane.b32.xlu0 %v546, 118
  %v553 = vpop.permute.xlu0 %552
  %554 = vrot.lane.b32.xlu0 %v547, 118
  %v555 = vpop.permute.xlu0 %554
  %556 = vrot.lane.b32.xlu0 %v548, 118
  %v557 = vpop.permute.xlu0 %556
  %vm558 = vcmask 965632
  %v559 = vsel %vm558, %v553, %v555
  %v560 = vsel %vm558, %v555, %v557
  %563 = vst [vmem:[#allocation4 + $0x70] sm:$0xff] %v559
  %564 = vst [vmem:[#allocation4 + $0x78] sm:$0xff] %v560
  %v565 = vld [vmem:[#allocation3 + $0x8] sm:$0xff]
  %v566 = vld [vmem:[#allocation3 + $0x10] sm:$0xff]
  %v567 = vld [vmem:[#allocation3 + $0x18] sm:$0xff]
  %571 = vrot.lane.b32.xlu0 %v565, 117
  %v572 = vpop.permute.xlu0 %571
  %573 = vrot.lane.b32.xlu0 %v566, 117
  %v574 = vpop.permute.xlu0 %573
  %575 = vrot.lane.b32.xlu0 %v567, 117
  %v576 = vpop.permute.xlu0 %575
  %vm577 = vcmask 957440
  %v578 = vsel %vm577, %v572, %v574
  %v579 = vsel %vm577, %v574, %v576
  %582 = vst [vmem:[#allocation4 + $0x80] sm:$0xff] %v578
  %583 = vst [vmem:[#allocation4 + $0x88] sm:$0xff] %v579
  %v584 = vld [vmem:[%s6] sm:$0xff]
  %v585 = vld [vmem:[#allocation4] sm:$0xff]
  %v586 = vld [vmem:[#allocation4 + $0x8] sm:$0xff]
  %v587 = vld [vmem:[#allocation4 + $0x10] sm:$0xff]
  %v588 = vld [vmem:[#allocation4 + $0x18] sm:$0xff]
  %v589 = vld [vmem:[#allocation4 + $0x20] sm:$0xff]
  %v590 = vld [vmem:[#allocation4 + $0x28] sm:$0xff]
  %v591 = vld [vmem:[#allocation4 + $0x30] sm:$0xff]
  %v592 = vld [vmem:[#allocation4 + $0x38] sm:$0xff]
  %v593 = vld [vmem:[#allocation4 + $0x40] sm:$0xff]
  %v594 = vld [vmem:[#allocation4 + $0x48] sm:$0xff]
  %v595 = vld [vmem:[#allocation4 + $0x50] sm:$0xff]
  %v596 = vld [vmem:[#allocation4 + $0x58] sm:$0xff]
  %v597 = vld [vmem:[#allocation4 + $0x60] sm:$0xff]
  %v598 = vld [vmem:[#allocation4 + $0x68] sm:$0xff]
  %v599 = vld [vmem:[#allocation4 + $0x70] sm:$0xff]
  %v600 = vld [vmem:[#allocation4 + $0x78] sm:$0xff]
  %v601 = vld [vmem:[#allocation4 + $0x80] sm:$0xff]
  %v602 = vld [vmem:[#allocation4 + $0x88] sm:$0xff]
  %v604 = vsel %vm247, %v584, 0
  %606 = vmatpush.msra.mxu0 0.0
  %607 = vmatpush.msra.mxu0 0.0
  %608 = vmatpush.msra.mxu0 0.0
  %609 = vmatpush.msra.mxu0 0.0
  %610 = vmatpush.msra.mxu0 0.0
  %611 = vmatpush.msra.mxu0 0.0
  %612 = vmatpush.msra.mxu0 0.0
  %613 = vmatpush.msra.mxu0 %v601
  %614 = vmatpush.msra.mxu0 %v599
  %615 = vmatpush.msra.mxu0 %v597
  %616 = vmatpush.msra.mxu0 %v595
  %617 = vmatpush.msra.mxu0 %v593
  %618 = vmatpush.msra.mxu0 %v591
  %619 = vmatpush.msra.mxu0 %v589
  %620 = vmatpush.msra.mxu0 %v587
  %621 = vmatpush.msra.mxu0 %v585
  %622 = vmatmul.f32.gmra.mxu0 %v604
  %v623 = vpop.f32.mrf.mxu0
  %v624 = vadd.f32 0.0, %v623
  %625 = vdwg.mxu0
  %626 = vmatpush.msra.mxu0 0.0
  %627 = vmatpush.msra.mxu0 0.0
  %628 = vmatpush.msra.mxu0 0.0
  %629 = vmatpush.msra.mxu0 0.0
  %630 = vmatpush.msra.mxu0 0.0
  %631 = vmatpush.msra.mxu0 0.0
  %632 = vmatpush.msra.mxu0 0.0
  %633 = vmatpush.msra.mxu0 %v602
  %634 = vmatpush.msra.mxu0 %v600
  %635 = vmatpush.msra.mxu0 %v598
  %636 = vmatpush.msra.mxu0 %v596
  %637 = vmatpush.msra.mxu0 %v594
  %638 = vmatpush.msra.mxu0 %v592
  %639 = vmatpush.msra.mxu0 %v590
  %640 = vmatpush.msra.mxu0 %v588
  %641 = vmatpush.msra.mxu0 %v586
  %642 = vmatmul.f32.gmra.mxu0 %v604
  %v643 = vpop.f32.mrf.mxu0
  %v644 = vadd.f32 0.0, %v643
  %645 = vdwg.mxu0
  %646 = vmatpush.msra.mxu0 %v57
  %647 = vmatpush.msra.mxu0 %v56
  %648 = vmatpush.msra.mxu0 %v55
  %649 = vmatpush.msra.mxu0 %v54
  %650 = vmatpush.msra.mxu0 %v53
  %651 = vmatpush.msra.mxu0 %v52
  %652 = vmatpush.msra.mxu0 %v51
  %653 = vmatpush.msra.mxu0 %v50
  %654 = vmatpush.msra.mxu0 %v49
  %655 = vmatpush.msra.mxu0 %v48
  %656 = vmatpush.msra.mxu0 %v47
  %657 = vmatpush.msra.mxu0 %v46
  %658 = vmatpush.msra.mxu0 %v45
  %659 = vmatpush.msra.mxu0 %v44
  %660 = vmatpush.msra.mxu0 %v43
  %661 = vmatpush.msra.mxu0 %v42
  %662 = vmatmul.f32.gmra.mxu0 %v624
  %v663 = vpop.f32.mrf.mxu0
  %v664 = vadd.f32 0.0, %v663
  %665 = vdwg.mxu0
  %666 = vmatpush.msra.mxu0 %v73
  %667 = vmatpush.msra.mxu0 %v72
  %668 = vmatpush.msra.mxu0 %v71
  %669 = vmatpush.msra.mxu0 %v70
  %670 = vmatpush.msra.mxu0 %v69
  %671 = vmatpush.msra.mxu0 %v68
  %672 = vmatpush.msra.mxu0 %v67
  %673 = vmatpush.msra.mxu0 %v66
  %674 = vmatpush.msra.mxu0 %v65
  %675 = vmatpush.msra.mxu0 %v64
  %676 = vmatpush.msra.mxu0 %v63
  %677 = vmatpush.msra.mxu0 %v62
  %678 = vmatpush.msra.mxu0 %v61
  %679 = vmatpush.msra.mxu0 %v60
  %680 = vmatpush.msra.mxu0 %v59
  %681 = vmatpush.msra.mxu0 %v58
  %682 = vmatmul.f32.gmra.mxu0 %v644
  %v683 = vpop.f32.mrf.mxu0
  %v684 = vadd.f32 %v664, %v683
  %685 = vdwg.mxu0
  %v686 = vmul.f32 %v624, %v624
  %v687 = vmul.f32 %v644, %v644
  %688 = vmatpush.msra.mxu0 %v57
  %689 = vmatpush.msra.mxu0 %v56
  %690 = vmatpush.msra.mxu0 %v55
  %691 = vmatpush.msra.mxu0 %v54
  %692 = vmatpush.msra.mxu0 %v53
  %693 = vmatpush.msra.mxu0 %v52
  %694 = vmatpush.msra.mxu0 %v51
  %695 = vmatpush.msra.mxu0 %v50
  %696 = vmatpush.msra.mxu0 %v49
  %697 = vmatpush.msra.mxu0 %v48
  %698 = vmatpush.msra.mxu0 %v47
  %699 = vmatpush.msra.mxu0 %v46
  %700 = vmatpush.msra.mxu0 %v45
  %701 = vmatpush.msra.mxu0 %v44
  %702 = vmatpush.msra.mxu0 %v43
  %703 = vmatpush.msra.mxu0 %v42
  %704 = vmatmul.f32.gmra.mxu0 %v686
  %v705 = vpop.f32.mrf.mxu0
  %v706 = vadd.f32 0.0, %v705
  %707 = vdwg.mxu0
  %708 = vmatpush.msra.mxu0 %v73
  %709 = vmatpush.msra.mxu0 %v72
  %710 = vmatpush.msra.mxu0 %v71
  %711 = vmatpush.msra.mxu0 %v70
  %712 = vmatpush.msra.mxu0 %v69
  %713 = vmatpush.msra.mxu0 %v68
  %714 = vmatpush.msra.mxu0 %v67
  %715 = vmatpush.msra.mxu0 %v66
  %716 = vmatpush.msra.mxu0 %v65
  %717 = vmatpush.msra.mxu0 %v64
  %718 = vmatpush.msra.mxu0 %v63
  %719 = vmatpush.msra.mxu0 %v62
  %720 = vmatpush.msra.mxu0 %v61
  %721 = vmatpush.msra.mxu0 %v60
  %722 = vmatpush.msra.mxu0 %v59
  %723 = vmatpush.msra.mxu0 %v58
  %724 = vmatmul.f32.gmra.mxu0 %v687
  %v725 = vpop.f32.mrf.mxu0
  %v726 = vadd.f32 %v706, %v725
  %727 = vdwg.mxu0
  %v728 = vmul.f32 %v684, 0.0078125
  %v729 = vmul.f32 %v726, 0.0078125
  %v730 = vmul.f32 %v728, %v728
  %v731 = vsub.f32 %v729, %v730
  %733 = vset.pattern.permute.xlu0 0
  %734 = vperm.xlu0 %733, %v728
  %v735 = vpop.permute.xlu0 %734
  %v737 = vsub.f32 %v624, %v735
  %v738 = vsub.f32 %v644, %v735
  %v739 = vadd.f32 %v731, 1e-05
  %v740 = vrsqrt.pop %v739
  %v741 = vmul.f32 %v740, %v739
  %v742 = vmul.f32 %v741, %v740
  %v743 = vmul.f32 0.5, %v742
  %v744 = vsub.f32 1.5, %v743
  %v745 = vmul.f32 %v740, %v744
  %vm746 = vweird.f32 %v739
  %vm747 = vweird.f32 %v740
  %vm748 = vmor %vm746, %vm747
  %v749 = vsel %vm748, %v740, %v745
  %751 = vset.pattern.permute.xlu0 0
  %752 = vperm.xlu0 %751, %v749
  %v753 = vpop.permute.xlu0 %752
  %v755 = vmul.f32 %v737, %v753
  %v756 = vmul.f32 %v738, %v753
  %v757 = vld [vmem:[%s7] sm:$0xff]
  %759 = vset.pattern.permute.xlu0 0
  %760 = vperm.xlu0 %759, %v757
  %v761 = vpop.permute.xlu0 %760
  %v763 = vmul.f32 %v755, %v761
  %v764 = vmul.f32 %v756, %v761
  %v765 = vld [vmem:[%s8] sm:$0xff]
  %767 = vset.pattern.permute.xlu0 0
  %768 = vperm.xlu0 %767, %v765
  %v769 = vpop.permute.xlu0 %768
  %v771 = vadd.f32 %v763, %v769
  %v772 = vadd.f32 %v764, %v769
  %v773 = vld [vmem:[%s150] sm:$0xff]
  %v774 = vld [vmem:[%s150 + $0x8] sm:$0xff]
  %v775 = vld [vmem:[%s150 + $0x10] sm:$0xff]
  %v776 = vld [vmem:[%s9] sm:$0xff]
  %780 = vrot.lane.b32.xlu0 %v773, 11
  %v781 = vpop.permute.xlu0 %780
  %782 = vrot.lane.b32.xlu0 %v774, 11
  %v783 = vpop.permute.xlu0 %782
  %784 = vrot.lane.b32.xlu0 %v775, 11
  %v785 = vpop.permute.xlu0 %784
  %v786 = vsel %vm86, %v781, %v783
  %v787 = vsel %vm86, %v783, %v785
  %vm790 = vcmask 64512
  %v792 = vsel %vm790, %v776, 0
  %794 = vmatpush.msra.mxu0 0.0
  %795 = vmatpush.msra.mxu0 0.0
  %796 = vmatpush.msra.mxu0 0.0
  %797 = vmatpush.msra.mxu0 0.0
  %798 = vmatpush.msra.mxu0 0.0
  %799 = vmatpush.msra.mxu0 0.0
  %800 = vmatpush.msra.mxu0 0.0
  %801 = vmatpush.msra.mxu0 0.0
  %802 = vmatpush.msra.mxu0 0.0
  %803 = vmatpush.msra.mxu0 0.0
  %804 = vmatpush.msra.mxu0 0.0
  %805 = vmatpush.msra.mxu0 0.0
  %806 = vmatpush.msra.mxu0 0.0
  %807 = vmatpush.msra.mxu0 0.0
  %808 = vmatpush.msra.mxu0 0.0
  %809 = vmatpush.msra.mxu0 %v786
  %810 = vmatmul.f32.gmra.mxu0 %v792
  %v811 = vpop.f32.mrf.mxu0
  %v812 = vadd.f32 0.0, %v811
  %813 = vdwg.mxu0
  %814 = vmatpush.msra.mxu0 0.0
  %815 = vmatpush.msra.mxu0 0.0
  %816 = vmatpush.msra.mxu0 0.0
  %817 = vmatpush.msra.mxu0 0.0
  %818 = vmatpush.msra.mxu0 0.0
  %819 = vmatpush.msra.mxu0 0.0
  %820 = vmatpush.msra.mxu0 0.0
  %821 = vmatpush.msra.mxu0 0.0
  %822 = vmatpush.msra.mxu0 0.0
  %823 = vmatpush.msra.mxu0 0.0
  %824 = vmatpush.msra.mxu0 0.0
  %825 = vmatpush.msra.mxu0 0.0
  %826 = vmatpush.msra.mxu0 0.0
  %827 = vmatpush.msra.mxu0 0.0
  %828 = vmatpush.msra.mxu0 0.0
  %829 = vmatpush.msra.mxu0 %v787
  %830 = vmatmul.f32.gmra.mxu0 %v792
  %v831 = vpop.f32.mrf.mxu0
  %v832 = vadd.f32 0.0, %v831
  %833 = vdwg.mxu0
  %834 = vmatpush.msra.mxu0 %v57
  %835 = vmatpush.msra.mxu0 %v56
  %836 = vmatpush.msra.mxu0 %v55
  %837 = vmatpush.msra.mxu0 %v54
  %838 = vmatpush.msra.mxu0 %v53
  %839 = vmatpush.msra.mxu0 %v52
  %840 = vmatpush.msra.mxu0 %v51
  %841 = vmatpush.msra.mxu0 %v50
  %842 = vmatpush.msra.mxu0 %v49
  %843 = vmatpush.msra.mxu0 %v48
  %844 = vmatpush.msra.mxu0 %v47
  %845 = vmatpush.msra.mxu0 %v46
  %846 = vmatpush.msra.mxu0 %v45
  %847 = vmatpush.msra.mxu0 %v44
  %848 = vmatpush.msra.mxu0 %v43
  %849 = vmatpush.msra.mxu0 %v42
  %850 = vmatmul.f32.gmra.mxu0 %v812
  %v851 = vpop.f32.mrf.mxu0
  %v852 = vadd.f32 0.0, %v851
  %853 = vdwg.mxu0
  %854 = vmatpush.msra.mxu0 %v73
  %855 = vmatpush.msra.mxu0 %v72
  %856 = vmatpush.msra.mxu0 %v71
  %857 = vmatpush.msra.mxu0 %v70
  %858 = vmatpush.msra.mxu0 %v69
  %859 = vmatpush.msra.mxu0 %v68
  %860 = vmatpush.msra.mxu0 %v67
  %861 = vmatpush.msra.mxu0 %v66
  %862 = vmatpush.msra.mxu0 %v65
  %863 = vmatpush.msra.mxu0 %v64
  %864 = vmatpush.msra.mxu0 %v63
  %865 = vmatpush.msra.mxu0 %v62
  %866 = vmatpush.msra.mxu0 %v61
  %867 = vmatpush.msra.mxu0 %v60
  %868 = vmatpush.msra.mxu0 %v59
  %869 = vmatpush.msra.mxu0 %v58
  %870 = vmatmul.f32.gmra.mxu0 %v832
  %v871 = vpop.f32.mrf.mxu0
  %v872 = vadd.f32 %v852, %v871
  %873 = vdwg.mxu0
  %v874 = vmul.f32 %v812, %v812
  %v875 = vmul.f32 %v832, %v832
  %876 = vmatpush.msra.mxu0 %v57
  %877 = vmatpush.msra.mxu0 %v56
  %878 = vmatpush.msra.mxu0 %v55
  %879 = vmatpush.msra.mxu0 %v54
  %880 = vmatpush.msra.mxu0 %v53
  %881 = vmatpush.msra.mxu0 %v52
  %882 = vmatpush.msra.mxu0 %v51
  %883 = vmatpush.msra.mxu0 %v50
  %884 = vmatpush.msra.mxu0 %v49
  %885 = vmatpush.msra.mxu0 %v48
  %886 = vmatpush.msra.mxu0 %v47
  %887 = vmatpush.msra.mxu0 %v46
  %888 = vmatpush.msra.mxu0 %v45
  %889 = vmatpush.msra.mxu0 %v44
  %890 = vmatpush.msra.mxu0 %v43
  %891 = vmatpush.msra.mxu0 %v42
  %892 = vmatmul.f32.gmra.mxu0 %v874
  %v893 = vpop.f32.mrf.mxu0
  %v894 = vadd.f32 0.0, %v893
  %895 = vdwg.mxu0
  %896 = vmatpush.msra.mxu0 %v73
  %897 = vmatpush.msra.mxu0 %v72
  %898 = vmatpush.msra.mxu0 %v71
  %899 = vmatpush.msra.mxu0 %v70
  %900 = vmatpush.msra.mxu0 %v69
  %901 = vmatpush.msra.mxu0 %v68
  %902 = vmatpush.msra.mxu0 %v67
  %903 = vmatpush.msra.mxu0 %v66
  %904 = vmatpush.msra.mxu0 %v65
  %905 = vmatpush.msra.mxu0 %v64
  %906 = vmatpush.msra.mxu0 %v63
  %907 = vmatpush.msra.mxu0 %v62
  %908 = vmatpush.msra.mxu0 %v61
  %909 = vmatpush.msra.mxu0 %v60
  %910 = vmatpush.msra.mxu0 %v59
  %911 = vmatpush.msra.mxu0 %v58
  %912 = vmatmul.f32.gmra.mxu0 %v875
  %v913 = vpop.f32.mrf.mxu0
  %v914 = vadd.f32 %v894, %v913
  %915 = vdwg.mxu0
  %v916 = vmul.f32 %v872, 0.0078125
  %v917 = vmul.f32 %v914, 0.0078125
  %v918 = vmul.f32 %v916, %v916
  %v919 = vsub.f32 %v917, %v918
  %921 = vset.pattern.permute.xlu0 0
  %922 = vperm.xlu0 %921, %v916
  %v923 = vpop.permute.xlu0 %922
  %v925 = vsub.f32 %v812, %v923
  %v926 = vsub.f32 %v832, %v923
  %v927 = vadd.f32 %v919, 1e-05
  %v928 = vrsqrt.pop %v927
  %v929 = vmul.f32 %v928, %v927
  %v930 = vmul.f32 %v929, %v928
  %v931 = vmul.f32 0.5, %v930
  %v932 = vsub.f32 1.5, %v931
  %v933 = vmul.f32 %v928, %v932
  %vm934 = vweird.f32 %v927
  %vm935 = vweird.f32 %v928
  %vm936 = vmor %vm934, %vm935
  %v937 = vsel %vm936, %v928, %v933
  %939 = vset.pattern.permute.xlu0 0
  %940 = vperm.xlu0 %939, %v937
  %v941 = vpop.permute.xlu0 %940
  %v943 = vmul.f32 %v925, %v941
  %v944 = vmul.f32 %v926, %v941
  %v945 = vld [vmem:[%s10] sm:$0xff]
  %947 = vset.pattern.permute.xlu0 0
  %948 = vperm.xlu0 %947, %v945
  %v949 = vpop.permute.xlu0 %948
  %v951 = vmul.f32 %v943, %v949
  %v952 = vmul.f32 %v944, %v949
  %v953 = vld [vmem:[%s11] sm:$0xff]
  %955 = vset.pattern.permute.xlu0 0
  %956 = vperm.xlu0 %955, %v953
  %v957 = vpop.permute.xlu0 %956
  %v959 = vadd.f32 %v951, %v957
  %v960 = vadd.f32 %v952, %v957
  %v961 = vadd.f32 %v771, %v959
  %v962 = vadd.f32 %v772, %v960
  %v963 = vmax.f32 %v961, 0.0
  %v964 = vmax.f32 %v962, 0.0
  %965 = vst [vmem:[%s12] sm:$0xff] %v963
  %966 = vst [vmem:[%s12 + $0x8] sm:$0xff] %v964
  // Predicated region
  $region50: #{basic_block_forward.1} parent=0 // pred_check
    _
  $region51: #{basic_block_forward.1} parent=0 // pred_check_branch
    %968 = sbr.rel (0) target = $region53
  $region52: #{basic_block_forward.1} parent=0 // pred_region
    _
  $region53: #{basic_block_forward.1} parent=0 // pred_fallthru
    _
  // Predicated region
  $region54: #{basic_block_forward.1} parent=0 // pred_check
    _
  $region55: #{basic_block_forward.1} parent=0 // pred_check_branch
    %970 = sbr.rel (0) target = $region57
  $region56: #{basic_block_forward.1} parent=0 // pred_region
    _
  $region57: #{basic_block_forward.1} parent=0 // pred_fallthru
    _

</llo_original>
